<compile_context>
chip_gen: v6e
topology: v6e:2x2x1
jax: 0.10.0
libtpu: 0.0.40
codegen_flags: <defaults>
</compile_context>

<pallas_src>
import functools
import math

import jax
import jax.numpy as jnp
from jax import lax
from jax.experimental import pallas as pl
from jax.experimental.pallas import tpu as pltpu

PAD_ID = 1


def _round_up(a, b):
    return ((a + b - 1) // b) * b


# --------------------------- attention kernel ---------------------------

def _attn_kernel(qvalid_ref, kvalid_ref, q_ref, k_ref, v_ref, o_ref, *,
                 scale, causal, q_offset):
    # q: (B,T,H) bf16   k/v: (B,L,H) bf16   qvalid: (B,T) i32   kvalid: (B,L) i32
    q = q_ref[...]
    k = k_ref[...]
    v = v_ref[...]
    B, T, _ = q.shape
    L = k.shape[1]

    # scores on the MXU (bf16 in, f32 accumulate); softmax math stays f32.
    s = jnp.einsum('btd,bld->btl', q, k,
                   preferred_element_type=jnp.float32) * scale

    # build the pad / causal mask in-kernel (no (B,T,L) int32 mask DMA).
    qv = qvalid_ref[...]
    kv = kvalid_ref[...]
    mask = (qv[:, :, None] != 0) & (kv[:, None, :] != 0)
    if causal:
        t_idx = lax.broadcasted_iota(jnp.int32, (B, T, L), 1) + q_offset
        l_idx = lax.broadcasted_iota(jnp.int32, (B, T, L), 2)
        mask = mask & (l_idx <= t_idx)

    s = jnp.where(mask, s, -1e9)
    m = jnp.max(s, axis=-1, keepdims=True)
    p = jnp.exp(s - m)
    denom = jnp.sum(p, axis=-1, keepdims=True)
    p = p * pl.reciprocal(denom, approx=True)          # EUP slot, not VPU divide

    o = jnp.einsum('btl,bld->btd', p.astype(v.dtype), v,
                   preferred_element_type=jnp.float32)
    o_ref[...] = o


def masked_attention(q, k, v, qvalid, kvalid, *, scale, causal, q_offset):
    B, T, H = q.shape
    L = k.shape[1]
    kern = functools.partial(_attn_kernel, scale=scale, causal=causal,
                             q_offset=q_offset)
    return pl.pallas_call(
        kern,
        out_shape=jax.ShapeDtypeStruct((B, T, H), jnp.float32),
        grid=(1,),
        in_specs=[
            pl.BlockSpec((B, T), lambda i: (0, 0)),
            pl.BlockSpec((B, L), lambda i: (0, 0)),
            pl.BlockSpec((B, T, H), lambda i: (0, 0, 0)),
            pl.BlockSpec((B, L, H), lambda i: (0, 0, 0)),
            pl.BlockSpec((B, L, H), lambda i: (0, 0, 0)),
        ],
        out_specs=pl.BlockSpec((B, T, H), lambda i: (0, 0, 0)),
        compiler_params=pltpu.CompilerParams(
            dimension_semantics=("arbitrary",),
            vmem_limit_bytes=32 * 1024 * 1024),
    )(qvalid, kvalid,
      q.astype(jnp.bfloat16), k.astype(jnp.bfloat16), v.astype(jnp.bfloat16))


# --------------------- fused lm_head + cross entropy ---------------------

def _lm_ce_kernel(x_ref, w_ref, lbl_ref, loss_ref, cnt_ref,
                  m_sc, l_sc, pick_sc, *, tn, pad_id):
    # x: (TM,H) bf16   w: (H,TN) bf16   lbl: (TM,1) i32
    # loss/cnt: (1,8,128) f32 (per-N-tile partials, lane-dense store)
    j = pl.program_id(1)
    nj = pl.num_programs(1)

    @pl.when(j == 0)
    def _():
        m_sc[...] = jnp.full(m_sc.shape, -1e30, jnp.float32)
        l_sc[...] = jnp.zeros(l_sc.shape, jnp.float32)
        pick_sc[...] = jnp.zeros(pick_sc.shape, jnp.float32)

    # (TM,H) @ (H,TN) on the MXU; logits tile never leaves VMEM.
    logits = jnp.dot(x_ref[...], w_ref[...],
                     preferred_element_type=jnp.float32)

    labels = lbl_ref[...]                                          # (TM,1) i32
    col = lax.broadcasted_iota(jnp.int32, logits.shape, 1) + j * tn
    pick_sc[...] += jnp.sum(jnp.where(col == labels, logits, 0.0),
                            axis=-1, keepdims=True)

    # online logsumexp across vocab tiles
    m_prev = m_sc[...]
    m_new = jnp.maximum(m_prev, jnp.max(logits, axis=-1, keepdims=True))
    l_sc[...] = (l_sc[...] * jnp.exp(m_prev - m_new)
                 + jnp.sum(jnp.exp(logits - m_new), axis=-1, keepdims=True))
    m_sc[...] = m_new

    @pl.when(j == nj - 1)
    def _():
        active = (labels != pad_id).astype(jnp.float32)            # (TM,1)
        lse = m_sc[...] + jnp.log(l_sc[...])
        per_row = (lse - pick_sc[...]) * active
        loss_ref[...] = jnp.broadcast_to(jnp.sum(per_row), loss_ref.shape)
        cnt_ref[...] = jnp.broadcast_to(jnp.sum(active), cnt_ref.shape)


def fused_lm_head_ce(x, labels, w_t, *, tn):
    """x: (Npad,H) bf16, labels: (Npad,1) i32, w_t: (H,V) bf16 (pre-transposed).

    Returns (loss_sum, count) f32 scalars. Never materialises (N,V) logits.
    """
    Npad, H = x.shape
    V = w_t.shape[1]
    tm = min(128, Npad)
    assert Npad % tm == 0 and V % tn == 0
    ni, nj = Npad // tm, V // tn

    kern = functools.partial(_lm_ce_kernel, tn=tn, pad_id=PAD_ID)
    cost = pl.CostEstimate(
        flops=2 * Npad * H * V,
        transcendentals=Npad * V,
        bytes_accessed=Npad * H * 2 + H * V * 2 + Npad * 4 + ni * 8 * 128 * 8)

    loss_parts, cnt_parts = pl.pallas_call(
        kern,
        out_shape=(jax.ShapeDtypeStruct((ni, 8, 128), jnp.float32),
                   jax.ShapeDtypeStruct((ni, 8, 128), jnp.float32)),
        grid=(ni, nj),                                   # V (reduction) is last
        in_specs=[
            pl.BlockSpec((tm, H), lambda i, j: (i, 0)),  # x rows, resident over j
            pl.BlockSpec((H, tn), lambda i, j: (0, j)),  # vocab tile of weights
            pl.BlockSpec((tm, 1), lambda i, j: (i, 0)),  # labels, resident over j
        ],
        out_specs=(pl.BlockSpec((1, 8, 128), lambda i, j: (i, 0, 0)),
                   pl.BlockSpec((1, 8, 128), lambda i, j: (i, 0, 0))),
        scratch_shapes=[pltpu.VMEM((tm, 1), jnp.float32),   # running max
                        pltpu.VMEM((tm, 1), jnp.float32),   # running sum
                        pltpu.VMEM((tm, 1), jnp.float32)],  # picked logit
        compiler_params=pltpu.CompilerParams(
            dimension_semantics=("parallel", "arbitrary"),
            vmem_limit_bytes=32 * 1024 * 1024),
        cost_estimate=cost,
    )(x, w_t, labels)

    return jnp.sum(loss_parts[:, 0, 0]), jnp.sum(cnt_parts[:, 0, 0])


# ----------------------------- model glue -----------------------------

def init_params(key, vocab_size, hidden_size):
    ks = jax.random.split(key, 9)

    def w(k, shape):
        return jax.random.normal(k, shape, dtype=jnp.float32) * 0.02

    return {
        "w_emb":  w(ks[0], (vocab_size, hidden_size)),   # tied lm_head weight
        "enc_wq": w(ks[1], (hidden_size, hidden_size)),
        "enc_wk": w(ks[2], (hidden_size, hidden_size)),
        "enc_wv": w(ks[3], (hidden_size, hidden_size)),
        "enc_wo": w(ks[4], (hidden_size, hidden_size)),
        "dec_wq": w(ks[5], (hidden_size, hidden_size)),
        "dec_wk": w(ks[6], (hidden_size, hidden_size)),
        "dec_wv": w(ks[7], (hidden_size, hidden_size)),
        "dec_wo": w(ks[8], (hidden_size, hidden_size)),
        # NOTE: `self.dense` exists in the PyTorch module but is unused in forward().
    }


def seq2seq_forward(params, source_ids, target_ids):
    """Replicates Seq2Seq.forward(source_ids, target_ids) with loss_fun='CE'."""
    B, S = source_ids.shape
    T = target_ids.shape[1]
    V, H = params["w_emb"].shape
    scale = 1.0 / math.sqrt(H)

    # ---- encoder: mask = ne(1)[:,None,:] * ne(1)[:,:,None], built in-kernel
    src_ok = (source_ids != PAD_ID).astype(jnp.int32)                 # (B,S)
    emb_src = jnp.take(params["w_emb"], source_ids, axis=0)           # (B,S,H)
    q_e = emb_src @ params["enc_wq"]
    k_e = emb_src @ params["enc_wk"]
    v_e = emb_src @ params["enc_wv"]
    enc_attn = masked_attention(q_e, k_e, v_e, src_ok, src_ok,
                                scale=scale, causal=False, q_offset=0)
    enc_h = emb_src + enc_attn @ params["enc_wo"]                     # (B,S,H)
    k_src = enc_h @ params["dec_wk"]                                  # cached K
    v_src = enc_h @ params["dec_wv"]                                  # cached V

    # ---- decoder: mask = tril-bias[S:S+T, :S+T] & ids.ne(1), built in-kernel
    ids = jnp.concatenate([source_ids, target_ids], axis=-1)          # (B,S+T)
    kvalid = (ids != PAD_ID).astype(jnp.int32)
    qvalid = jnp.ones((B, T), jnp.int32)

    emb_tgt = jnp.take(params["w_emb"], target_ids, axis=0)           # (B,T,H)
    q_d = emb_tgt @ params["dec_wq"]
    k_all = jnp.concatenate([k_src, emb_tgt @ params["dec_wk"]], axis=1)
    v_all = jnp.concatenate([v_src, emb_tgt @ params["dec_wv"]], axis=1)
    dec_attn = masked_attention(q_d, k_all, v_all, qvalid, kvalid,
                                scale=scale, causal=True, q_offset=S)
    out = emb_tgt + dec_attn @ params["dec_wo"]                       # (B,T,H)

    # ---- fused tied lm_head + shifted masked CE
    # lm_logits[:, -1, :] is discarded by the shift -> only project T-1 rows.
    N = B * (T - 1)
    hid = out[:, :T - 1, :].reshape(N, H)
    shift_labels = target_ids[:, 1:].reshape(N)

    tm = min(128, _round_up(N, 8))
    n_pad = _round_up(N, tm)
    x = jnp.zeros((n_pad, H), jnp.bfloat16).at[:N].set(hid.astype(jnp.bfloat16))
    labels = jnp.full((n_pad, 1), PAD_ID, jnp.int32).at[:N, 0].set(
        shift_labels.astype(jnp.int32))                               # pad rows inactive
    w_t = params["w_emb"].T.astype(jnp.bfloat16)                      # (H,V), lane-dense V
    tn = 128 if V % 128 == 0 else V   # for real vocabs use 512-2048 (v7x: smaller)

    loss_sum, count = fused_lm_head_ce(x, labels, w_t, tn=tn)
    loss = loss_sum / jnp.maximum(count, 1.0)   # guard: all-pad batch
    # outputs = (loss, loss * active_loss.sum(), active_loss.sum())
    return loss, loss * count, count


# ----------------------------- main -----------------------------

if __name__ == "__main__":
    VOCAB = 512
    HIDDEN = 64
    B, S, T = 2, 8, 8

    key = jax.random.PRNGKey(0)
    k_param, k_src, k_tgt = jax.random.split(key, 3)

    params = init_params(k_param, VOCAB, HIDDEN)

    source_ids = jax.random.randint(k_src, (B, S), 2, VOCAB, dtype=jnp.int32)
    target_ids = jax.random.randint(k_tgt, (B, T), 2, VOCAB, dtype=jnp.int32)
    # add some padding (pad_id == 1), as in real batches
    source_ids = source_ids.at[0, 6:].set(PAD_ID)
    target_ids = target_ids.at[1, 5:].set(PAD_ID)

    loss, weighted, n_active = jax.jit(seq2seq_forward)(params, source_ids, target_ids)
    jax.block_until_ready((loss, weighted, n_active))
    print("KERNEL_OK")
</pallas_src>

<mosaic_0001>
module attributes {stable_mosaic.version = 11 : i64} {
  func.func @_attn_kernel(%arg0: i32, %arg1: memref<2x8xi32, #tpu.memory_space<vmem>>, %arg2: memref<2x8xi32, #tpu.memory_space<vmem>>, %arg3: memref<2x8x64xbf16, #tpu.memory_space<vmem>>, %arg4: memref<2x8x64xbf16, #tpu.memory_space<vmem>>, %arg5: memref<2x8x64xbf16, #tpu.memory_space<vmem>>, %arg6: memref<2x8x64xf32, #tpu.memory_space<vmem>>) attributes {dimension_semantics = [#tpu.dimension_semantics<arbitrary>], iteration_bounds = array<i64: 1>, scalar_prefetch = 0 : i64, scratch_operands = 0 : i64, tpu.core_type = #tpu.core_type<tc>, window_params = [{pipeline_mode = #tpu.pipeline_mode<synchronous>, transform_indices = @transform_0, window_bounds = array<i64: 2, 8>}, {pipeline_mode = #tpu.pipeline_mode<synchronous>, transform_indices = @transform_1, window_bounds = array<i64: 2, 8>}, {pipeline_mode = #tpu.pipeline_mode<synchronous>, transform_indices = @transform_2, window_bounds = array<i64: 2, 8, 64>}, {pipeline_mode = #tpu.pipeline_mode<synchronous>, transform_indices = @transform_3, window_bounds = array<i64: 2, 8, 64>}, {pipeline_mode = #tpu.pipeline_mode<synchronous>, transform_indices = @transform_4, window_bounds = array<i64: 2, 8, 64>}, {pipeline_mode = #tpu.pipeline_mode<synchronous>, transform_indices = @transform_5, window_bounds = array<i64: 2, 8, 64>}]} {
    %c0 = arith.constant 0 : index
    %c0_0 = arith.constant 0 : index
    %c0_1 = arith.constant 0 : index
    %0 = vector.load %arg3[%c0, %c0_0, %c0_1] : memref<2x8x64xbf16, #tpu.memory_space<vmem>>, vector<2x8x64xbf16>
    %c0_2 = arith.constant 0 : index
    %c0_3 = arith.constant 0 : index
    %c0_4 = arith.constant 0 : index
    %1 = vector.load %arg4[%c0_2, %c0_3, %c0_4] : memref<2x8x64xbf16, #tpu.memory_space<vmem>>, vector<2x8x64xbf16>
    %c0_5 = arith.constant 0 : index
    %c0_6 = arith.constant 0 : index
    %c0_7 = arith.constant 0 : index
    %2 = vector.load %arg5[%c0_5, %c0_6, %c0_7] : memref<2x8x64xbf16, #tpu.memory_space<vmem>>, vector<2x8x64xbf16>
    "tpu.trace_start"() <{level = 10 : i32, message = "btd,bld->btl"}> : () -> ()
    %cst = arith.constant dense<0.000000e+00> : vector<2x8x8xf32>
    %3 = tpu.matmul %0, %1, %cst {dimension_numbers = #tpu.dot_dimension_numbers<[2], [2], [1], [1], [0, 0, 0, 1, 1, 1], [0], [0]>} : vector<2x8x64xbf16>, vector<2x8x64xbf16>, vector<2x8x8xf32> -> vector<2x8x8xf32>
    "tpu.trace_stop"() : () -> ()
    %cst_8 = arith.constant 1.250000e-01 : f32
    %4 = vector.broadcast %cst_8 : f32 to vector<2x8x8xf32>
    %5 = arith.mulf %3, %4 : vector<2x8x8xf32>
    %c0_9 = arith.constant 0 : index
    %c0_10 = arith.constant 0 : index
    %6 = vector.load %arg1[%c0_9, %c0_10] : memref<2x8xi32, #tpu.memory_space<vmem>>, vector<2x8xi32>
    %c0_11 = arith.constant 0 : index
    %c0_12 = arith.constant 0 : index
    %7 = vector.load %arg2[%c0_11, %c0_12] : memref<2x8xi32, #tpu.memory_space<vmem>>, vector<2x8xi32>
    %8 = vector.shape_cast %6 : vector<2x8xi32> to vector<2x8x1xi32>
    %c0_i32 = arith.constant 0 : i32
    %9 = vector.broadcast %c0_i32 : i32 to vector<2x8x1xi32>
    %10 = arith.cmpi ne, %8, %9 : vector<2x8x1xi32>
    %11 = vector.shape_cast %7 : vector<2x8xi32> to vector<2x1x8xi32>
    %c0_i32_13 = arith.constant 0 : i32
    %12 = vector.broadcast %c0_i32_13 : i32 to vector<2x1x8xi32>
    %13 = arith.cmpi ne, %11, %12 : vector<2x1x8xi32>
    %14 = vector.broadcast %10 : vector<2x8x1xi1> to vector<2x8x8xi1>
    %15 = vector.broadcast %13 : vector<2x1x8xi1> to vector<2x8x8xi1>
    %16 = arith.andi %14, %15 : vector<2x8x8xi1>
    %cst_14 = arith.constant -1.000000e+09 : f32
    %17 = vector.broadcast %cst_14 : f32 to vector<2x8x8xf32>
    %18 = arith.select %16, %5, %17 : vector<2x8x8xi1>, vector<2x8x8xf32>
    %cst_15 = arith.constant dense<0xFF800000> : vector<2x8xf32>
    %19 = vector.multi_reduction <maximumf>, %18, %cst_15 [2] : vector<2x8x8xf32> to vector<2x8xf32>
    %20 = vector.shape_cast %19 : vector<2x8xf32> to vector<2x8x1xf32>
    %21 = vector.broadcast %20 : vector<2x8x1xf32> to vector<2x8x8xf32>
    %22 = arith.subf %18, %21 : vector<2x8x8xf32>
    %23 = math.exp %22 : vector<2x8x8xf32>
    %cst_16 = arith.constant dense<0.000000e+00> : vector<2x8xf32>
    %24 = vector.multi_reduction <add>, %23, %cst_16 [2] : vector<2x8x8xf32> to vector<2x8xf32>
    %25 = vector.shape_cast %24 : vector<2x8xf32> to vector<2x8x1xf32>
    %26 = tpu.reciprocal %25 {approx = true} : vector<2x8x1xf32> -> vector<2x8x1xf32>
    %27 = vector.broadcast %26 : vector<2x8x1xf32> to vector<2x8x8xf32>
    %28 = arith.mulf %23, %27 : vector<2x8x8xf32>
    %29 = arith.truncf %28 : vector<2x8x8xf32> to vector<2x8x8xbf16>
    "tpu.trace_start"() <{level = 10 : i32, message = "btl,bld->btd"}> : () -> ()
    %cst_17 = arith.constant dense<0.000000e+00> : vector<2x8x64xf32>
    %30 = tpu.matmul %29, %2, %cst_17 {dimension_numbers = #tpu.dot_dimension_numbers<[2], [1], [1], [2], [0, 0, 0, 1, 1, 2], [0], [0]>} : vector<2x8x8xbf16>, vector<2x8x64xbf16>, vector<2x8x64xf32> -> vector<2x8x64xf32>
    "tpu.trace_stop"() : () -> ()
    %c0_18 = arith.constant 0 : index
    %c0_19 = arith.constant 0 : index
    %c0_20 = arith.constant 0 : index
    %31 = vector.load %arg6[%c0_18, %c0_19, %c0_20] : memref<2x8x64xf32, #tpu.memory_space<vmem>>, vector<2x8x64xf32>
    tpu.vector_store %arg6[%c0_18, %c0_19, %c0_20], %30 {strides = array<i32>} : memref<2x8x64xf32, #tpu.memory_space<vmem>>, vector<2x8x64xf32>,
    return
  }
  func.func @transform_0(%arg0: i32) -> (i32, i32) {
    %c0_i32 = arith.constant 0 : i32
    %c0_i32_0 = arith.constant 0 : i32
    %c0_i32_1 = arith.constant 0 : i32
    return %c0_i32, %c0_i32_0 : i32, i32
  }
  func.func @transform_1(%arg0: i32) -> (i32, i32) {
    %c0_i32 = arith.constant 0 : i32
    %c0_i32_0 = arith.constant 0 : i32
    %c0_i32_1 = arith.constant 0 : i32
    return %c0_i32, %c0_i32_0 : i32, i32
  }
  func.func @transform_2(%arg0: i32) -> (i32, i32, i32) {
    %c0_i32 = arith.constant 0 : i32
    %c0_i32_0 = arith.constant 0 : i32
    %c0_i32_1 = arith.constant 0 : i32
    %c0_i32_2 = arith.constant 0 : i32
    return %c0_i32, %c0_i32_0, %c0_i32_1 : i32, i32, i32
  }
  func.func @transform_3(%arg0: i32) -> (i32, i32, i32) {
    %c0_i32 = arith.constant 0 : i32
    %c0_i32_0 = arith.constant 0 : i32
    %c0_i32_1 = arith.constant 0 : i32
    %c0_i32_2 = arith.constant 0 : i32
    return %c0_i32, %c0_i32_0, %c0_i32_1 : i32, i32, i32
  }
  func.func @transform_4(%arg0: i32) -> (i32, i32, i32) {
    %c0_i32 = arith.constant 0 : i32
    %c0_i32_0 = arith.constant 0 : i32
    %c0_i32_1 = arith.constant 0 : i32
    %c0_i32_2 = arith.constant 0 : i32
    return %c0_i32, %c0_i32_0, %c0_i32_1 : i32, i32, i32
  }
  func.func @transform_5(%arg0: i32) -> (i32, i32, i32) {
    %c0_i32 = arith.constant 0 : i32
    %c0_i32_0 = arith.constant 0 : i32
    %c0_i32_1 = arith.constant 0 : i32
    %c0_i32_2 = arith.constant 0 : i32
    return %c0_i32, %c0_i32_0, %c0_i32_1 : i32, i32, i32
  }
}

module attributes {stable_mosaic.version = 11 : i64} {
  func.func @_attn_kernel(%arg0: i32, %arg1: memref<2x8xi32, #tpu.memory_space<vmem>>, %arg2: memref<2x16xi32, #tpu.memory_space<vmem>>, %arg3: memref<2x8x64xbf16, #tpu.memory_space<vmem>>, %arg4: memref<2x16x64xbf16, #tpu.memory_space<vmem>>, %arg5: memref<2x16x64xbf16, #tpu.memory_space<vmem>>, %arg6: memref<2x8x64xf32, #tpu.memory_space<vmem>>) attributes {dimension_semantics = [#tpu.dimension_semantics<arbitrary>], iteration_bounds = array<i64: 1>, scalar_prefetch = 0 : i64, scratch_operands = 0 : i64, tpu.core_type = #tpu.core_type<tc>, window_params = [{pipeline_mode = #tpu.pipeline_mode<synchronous>, transform_indices = @transform_0, window_bounds = array<i64: 2, 8>}, {pipeline_mode = #tpu.pipeline_mode<synchronous>, transform_indices = @transform_1, window_bounds = array<i64: 2, 16>}, {pipeline_mode = #tpu.pipeline_mode<synchronous>, transform_indices = @transform_2, window_bounds = array<i64: 2, 8, 64>}, {pipeline_mode = #tpu.pipeline_mode<synchronous>, transform_indices = @transform_3, window_bounds = array<i64: 2, 16, 64>}, {pipeline_mode = #tpu.pipeline_mode<synchronous>, transform_indices = @transform_4, window_bounds = array<i64: 2, 16, 64>}, {pipeline_mode = #tpu.pipeline_mode<synchronous>, transform_indices = @transform_5, window_bounds = array<i64: 2, 8, 64>}]} {
    %c0 = arith.constant 0 : index
    %c0_0 = arith.constant 0 : index
    %c0_1 = arith.constant 0 : index
    %0 = vector.load %arg3[%c0, %c0_0, %c0_1] : memref<2x8x64xbf16, #tpu.memory_space<vmem>>, vector<2x8x64xbf16>
    %c0_2 = arith.constant 0 : index
    %c0_3 = arith.constant 0 : index
    %c0_4 = arith.constant 0 : index
    %1 = vector.load %arg4[%c0_2, %c0_3, %c0_4] : memref<2x16x64xbf16, #tpu.memory_space<vmem>>, vector<2x16x64xbf16>
    %c0_5 = arith.constant 0 : index
    %c0_6 = arith.constant 0 : index
    %c0_7 = arith.constant 0 : index
    %2 = vector.load %arg5[%c0_5, %c0_6, %c0_7] : memref<2x16x64xbf16, #tpu.memory_space<vmem>>, vector<2x16x64xbf16>
    "tpu.trace_start"() <{level = 10 : i32, message = "btd,bld->btl"}> : () -> ()
    %cst = arith.constant dense<0.000000e+00> : vector<2x8x16xf32>
    %3 = tpu.matmul %0, %1, %cst {dimension_numbers = #tpu.dot_dimension_numbers<[2], [2], [1], [1], [0, 0, 0, 1, 1, 1], [0], [0]>} : vector<2x8x64xbf16>, vector<2x16x64xbf16>, vector<2x8x16xf32> -> vector<2x8x16xf32>
    "tpu.trace_stop"() : () -> ()
    %cst_8 = arith.constant 1.250000e-01 : f32
    %4 = vector.broadcast %cst_8 : f32 to vector<2x8x16xf32>
    %5 = arith.mulf %3, %4 : vector<2x8x16xf32>
    %c0_9 = arith.constant 0 : index
    %c0_10 = arith.constant 0 : index
    %6 = vector.load %arg1[%c0_9, %c0_10] : memref<2x8xi32, #tpu.memory_space<vmem>>, vector<2x8xi32>
    %c0_11 = arith.constant 0 : index
    %c0_12 = arith.constant 0 : index
    %7 = vector.load %arg2[%c0_11, %c0_12] : memref<2x16xi32, #tpu.memory_space<vmem>>, vector<2x16xi32>
    %8 = vector.shape_cast %6 : vector<2x8xi32> to vector<2x8x1xi32>
    %c0_i32 = arith.constant 0 : i32
    %9 = vector.broadcast %c0_i32 : i32 to vector<2x8x1xi32>
    %10 = arith.cmpi ne, %8, %9 : vector<2x8x1xi32>
    %11 = vector.shape_cast %7 : vector<2x16xi32> to vector<2x1x16xi32>
    %c0_i32_13 = arith.constant 0 : i32
    %12 = vector.broadcast %c0_i32_13 : i32 to vector<2x1x16xi32>
    %13 = arith.cmpi ne, %11, %12 : vector<2x1x16xi32>
    %14 = vector.broadcast %10 : vector<2x8x1xi1> to vector<2x8x16xi1>
    %15 = vector.broadcast %13 : vector<2x1x16xi1> to vector<2x8x16xi1>
    %16 = arith.andi %14, %15 : vector<2x8x16xi1>
    %17 = tpu.iota {dimensions = array<i32: 1>} : vector<2x8x16xi32>
    %c8_i32 = arith.constant 8 : i32
    %18 = vector.broadcast %c8_i32 : i32 to vector<2x8x16xi32>
    %19 = arith.addi %17, %18 : vector<2x8x16xi32>
    %20 = tpu.iota {dimensions = array<i32: 2>} : vector<2x8x16xi32>
    %21 = arith.cmpi sle, %20, %19 : vector<2x8x16xi32>
    %22 = arith.andi %16, %21 : vector<2x8x16xi1>
    %cst_14 = arith.constant -1.000000e+09 : f32
    %23 = vector.broadcast %cst_14 : f32 to vector<2x8x16xf32>
    %24 = arith.select %22, %5, %23 : vector<2x8x16xi1>, vector<2x8x16xf32>
    %cst_15 = arith.constant dense<0xFF800000> : vector<2x8xf32>
    %25 = vector.multi_reduction <maximumf>, %24, %cst_15 [2] : vector<2x8x16xf32> to vector<2x8xf32>
    %26 = vector.shape_cast %25 : vector<2x8xf32> to vector<2x8x1xf32>
    %27 = vector.broadcast %26 : vector<2x8x1xf32> to vector<2x8x16xf32>
    %28 = arith.subf %24, %27 : vector<2x8x16xf32>
    %29 = math.exp %28 : vector<2x8x16xf32>
    %cst_16 = arith.constant dense<0.000000e+00> : vector<2x8xf32>
    %30 = vector.multi_reduction <add>, %29, %cst_16 [2] : vector<2x8x16xf32> to vector<2x8xf32>
    %31 = vector.shape_cast %30 : vector<2x8xf32> to vector<2x8x1xf32>
    %32 = tpu.reciprocal %31 {approx = true} : vector<2x8x1xf32> -> vector<2x8x1xf32>
    %33 = vector.broadcast %32 : vector<2x8x1xf32> to vector<2x8x16xf32>
    %34 = arith.mulf %29, %33 : vector<2x8x16xf32>
    %35 = arith.truncf %34 : vector<2x8x16xf32> to vector<2x8x16xbf16>
    "tpu.trace_start"() <{level = 10 : i32, message = "btl,bld->btd"}> : () -> ()
    %cst_17 = arith.constant dense<0.000000e+00> : vector<2x8x64xf32>
    %36 = tpu.matmul %35, %2, %cst_17 {dimension_numbers = #tpu.dot_dimension_numbers<[2], [1], [1], [2], [0, 0, 0, 1, 1, 2], [0], [0]>} : vector<2x8x16xbf16>, vector<2x16x64xbf16>, vector<2x8x64xf32> -> vector<2x8x64xf32>
    "tpu.trace_stop"() : () -> ()
    %c0_18 = arith.constant 0 : index
    %c0_19 = arith.constant 0 : index
    %c0_20 = arith.constant 0 : index
    %37 = vector.load %arg6[%c0_18, %c0_19, %c0_20] : memref<2x8x64xf32, #tpu.memory_space<vmem>>, vector<2x8x64xf32>
    tpu.vector_store %arg6[%c0_18, %c0_19, %c0_20], %36 {strides = array<i32>} : memref<2x8x64xf32, #tpu.memory_space<vmem>>, vector<2x8x64xf32>,
    return
  }
  func.func @transform_0(%arg0: i32) -> (i32, i32) {
    %c0_i32 = arith.constant 0 : i32
    %c0_i32_0 = arith.constant 0 : i32
    %c0_i32_1 = arith.constant 0 : i32
    return %c0_i32, %c0_i32_0 : i32, i32
  }
  func.func @transform_1(%arg0: i32) -> (i32, i32) {
    %c0_i32 = arith.constant 0 : i32
    %c0_i32_0 = arith.constant 0 : i32
    %c0_i32_1 = arith.constant 0 : i32
    return %c0_i32, %c0_i32_0 : i32, i32
  }
  func.func @transform_2(%arg0: i32) -> (i32, i32, i32) {
    %c0_i32 = arith.constant 0 : i32
    %c0_i32_0 = arith.constant 0 : i32
    %c0_i32_1 = arith.constant 0 : i32
    %c0_i32_2 = arith.constant 0 : i32
    return %c0_i32, %c0_i32_0, %c0_i32_1 : i32, i32, i32
  }
  func.func @transform_3(%arg0: i32) -> (i32, i32, i32) {
    %c0_i32 = arith.constant 0 : i32
    %c0_i32_0 = arith.constant 0 : i32
    %c0_i32_1 = arith.constant 0 : i32
    %c0_i32_2 = arith.constant 0 : i32
    return %c0_i32, %c0_i32_0, %c0_i32_1 : i32, i32, i32
  }
  func.func @transform_4(%arg0: i32) -> (i32, i32, i32) {
    %c0_i32 = arith.constant 0 : i32
    %c0_i32_0 = arith.constant 0 : i32
    %c0_i32_1 = arith.constant 0 : i32
    %c0_i32_2 = arith.constant 0 : i32
    return %c0_i32, %c0_i32_0, %c0_i32_1 : i32, i32, i32
  }
  func.func @transform_5(%arg0: i32) -> (i32, i32, i32) {
    %c0_i32 = arith.constant 0 : i32
    %c0_i32_0 = arith.constant 0 : i32
    %c0_i32_1 = arith.constant 0 : i32
    %c0_i32_2 = arith.constant 0 : i32
    return %c0_i32, %c0_i32_0, %c0_i32_1 : i32, i32, i32
  }
}

module attributes {stable_mosaic.version = 11 : i64} {
  func.func @_lm_ce_kernel(%arg0: i32, %arg1: i32, %arg2: memref<16x64xbf16, #tpu.memory_space<vmem>>, %arg3: memref<64x128xbf16, #tpu.memory_space<vmem>>, %arg4: memref<16x1xi32, #tpu.memory_space<vmem>>, %arg5: memref<1x8x128xf32, #tpu.memory_space<vmem>>, %arg6: memref<1x8x128xf32, #tpu.memory_space<vmem>>, %arg7: memref<16x1xf32, #tpu.memory_space<vmem>>, %arg8: memref<16x1xf32, #tpu.memory_space<vmem>>, %arg9: memref<16x1xf32, #tpu.memory_space<vmem>>) attributes {dimension_semantics = [#tpu.dimension_semantics<parallel>, #tpu.dimension_semantics<arbitrary>], iteration_bounds = array<i64: 1, 4>, scalar_prefetch = 0 : i64, scratch_operands = 3 : i64, tpu.core_type = #tpu.core_type<tc>, window_params = [{transform_indices = @transform_0, window_bounds = array<i64: 16, 64>}, {transform_indices = @transform_1, window_bounds = array<i64: 64, 128>}, {transform_indices = @transform_2, window_bounds = array<i64: 16, 1>}, {transform_indices = @transform_3, window_bounds = array<i64: 1, 8, 128>}, {transform_indices = @transform_4, window_bounds = array<i64: 1, 8, 128>}]} {
    %c0_i32 = arith.constant 0 : i32
    %0 = arith.cmpi eq, %arg1, %c0_i32 : i32
    %1 = arith.extui %0 : i1 to i32
    %c0_i32_0 = arith.constant 0 : i32
    %2 = arith.cmpi ne, %1, %c0_i32_0 : i32
    scf.if %2 {
      %cst_23 = arith.constant -1.000000e+30 : f32
      %39 = vector.broadcast %cst_23 : f32 to vector<16x1xf32>
      %c0_24 = arith.constant 0 : index
      %c0_25 = arith.constant 0 : index
      %40 = vector.load %arg7[%c0_24, %c0_25] : memref<16x1xf32, #tpu.memory_space<vmem>>, vector<16x1xf32>
      tpu.vector_store %arg7[%c0_24, %c0_25], %39 {strides = array<i32>} : memref<16x1xf32, #tpu.memory_space<vmem>>, vector<16x1xf32>,
      %cst_26 = arith.constant 0.000000e+00 : f32
      %41 = vector.broadcast %cst_26 : f32 to vector<16x1xf32>
      %c0_27 = arith.constant 0 : index
      %c0_28 = arith.constant 0 : index
      %42 = vector.load %arg8[%c0_27, %c0_28] : memref<16x1xf32, #tpu.memory_space<vmem>>, vector<16x1xf32>
      tpu.vector_store %arg8[%c0_27, %c0_28], %41 {strides = array<i32>} : memref<16x1xf32, #tpu.memory_space<vmem>>, vector<16x1xf32>,
      %cst_29 = arith.constant 0.000000e+00 : f32
      %43 = vector.broadcast %cst_29 : f32 to vector<16x1xf32>
      %c0_30 = arith.constant 0 : index
      %c0_31 = arith.constant 0 : index
      %44 = vector.load %arg9[%c0_30, %c0_31] : memref<16x1xf32, #tpu.memory_space<vmem>>, vector<16x1xf32>
      tpu.vector_store %arg9[%c0_30, %c0_31], %43 {strides = array<i32>} : memref<16x1xf32, #tpu.memory_space<vmem>>, vector<16x1xf32>,
    } else {
    }
    %c0 = arith.constant 0 : index
    %c0_1 = arith.constant 0 : index
    %3 = vector.load %arg2[%c0, %c0_1] : memref<16x64xbf16, #tpu.memory_space<vmem>>, vector<16x64xbf16>
    %c0_2 = arith.constant 0 : index
    %c0_3 = arith.constant 0 : index
    %4 = vector.load %arg3[%c0_2, %c0_3] : memref<64x128xbf16, #tpu.memory_space<vmem>>, vector<64x128xbf16>
    %cst = arith.constant dense<0.000000e+00> : vector<16x128xf32>
    %5 = tpu.matmul %3, %4, %cst {dimension_numbers = #tpu.dot_dimension_numbers<[1], [0], [0], [1], [0, 0, 1, 1], [], []>} : vector<16x64xbf16>, vector<64x128xbf16>, vector<16x128xf32> -> vector<16x128xf32>
    %c0_4 = arith.constant 0 : index
    %c0_5 = arith.constant 0 : index
    %6 = vector.load %arg4[%c0_4, %c0_5] : memref<16x1xi32, #tpu.memory_space<vmem>>, vector<16x1xi32>
    %7 = tpu.iota {dimensions = array<i32: 1>} : vector<16x128xi32>
    %c128_i32 = arith.constant 128 : i32
    %8 = arith.muli %arg1, %c128_i32 : i32
    %9 = vector.broadcast %8 : i32 to vector<16x128xi32>
    %10 = arith.addi %7, %9 : vector<16x128xi32>
    %c0_6 = arith.constant 0 : index
    %c0_7 = arith.constant 0 : index
    %11 = vector.load %arg9[%c0_6, %c0_7] : memref<16x1xf32, #tpu.memory_space<vmem>>, vector<16x1xf32>
    %12 = vector.broadcast %6 : vector<16x1xi32> to vector<16x128xi32>
    %13 = arith.cmpi eq, %10, %12 : vector<16x128xi32>
    %cst_8 = arith.constant 0.000000e+00 : f32
    %14 = vector.broadcast %cst_8 : f32 to vector<16x128xf32>
    %15 = arith.select %13, %5, %14 : vector<16x128xi1>, vector<16x128xf32>
    %cst_9 = arith.constant dense<0.000000e+00> : vector<16xf32>
    %16 = vector.multi_reduction <add>, %15, %cst_9 [1] : vector<16x128xf32> to vector<16xf32>
    %17 = vector.shape_cast %16 : vector<16xf32> to vector<16x1xf32>
    %18 = arith.addf %11, %17 : vector<16x1xf32>
    %c0_10 = arith.constant 0 : index
    %c0_11 = arith.constant 0 : index
    %19 = vector.load %arg9[%c0_10, %c0_11] : memref<16x1xf32, #tpu.memory_space<vmem>>, vector<16x1xf32>
    tpu.vector_store %arg9[%c0_10, %c0_11], %18 {strides = array<i32>} : memref<16x1xf32, #tpu.memory_space<vmem>>, vector<16x1xf32>,
    %c0_12 = arith.constant 0 : index
    %c0_13 = arith.constant 0 : index
    %20 = vector.load %arg7[%c0_12, %c0_13] : memref<16x1xf32, #tpu.memory_space<vmem>>, vector<16x1xf32>
    %cst_14 = arith.constant dense<0xFF800000> : vector<16xf32>
    %21 = vector.multi_reduction <maximumf>, %5, %cst_14 [1] : vector<16x128xf32> to vector<16xf32>
    %22 = vector.shape_cast %21 : vector<16xf32> to vector<16x1xf32>
    %23 = arith.maximumf %20, %22 : vector<16x1xf32>
    %c0_15 = arith.constant 0 : index
    %c0_16 = arith.constant 0 : index
    %24 = vector.load %arg8[%c0_15, %c0_16] : memref<16x1xf32, #tpu.memory_space<vmem>>, vector<16x1xf32>
    %25 = arith.subf %20, %23 : vector<16x1xf32>
    %26 = math.exp %25 : vector<16x1xf32>
    %27 = arith.mulf %24, %26 : vector<16x1xf32>
    %28 = vector.broadcast %23 : vector<16x1xf32> to vector<16x128xf32>
    %29 = arith.subf %5, %28 : vector<16x128xf32>
    %30 = math.exp %29 : vector<16x128xf32>
    %cst_17 = arith.constant dense<0.000000e+00> : vector<16xf32>
    %31 = vector.multi_reduction <add>, %30, %cst_17 [1] : vector<16x128xf32> to vector<16xf32>
    %32 = vector.shape_cast %31 : vector<16xf32> to vector<16x1xf32>
    %33 = arith.addf %27, %32 : vector<16x1xf32>
    %c0_18 = arith.constant 0 : index
    %c0_19 = arith.constant 0 : index
    %34 = vector.load %arg8[%c0_18, %c0_19] : memref<16x1xf32, #tpu.memory_space<vmem>>, vector<16x1xf32>
    tpu.vector_store %arg8[%c0_18, %c0_19], %33 {strides = array<i32>} : memref<16x1xf32, #tpu.memory_space<vmem>>, vector<16x1xf32>,
    %c0_20 = arith.constant 0 : index
    %c0_21 = arith.constant 0 : index
    %35 = vector.load %arg7[%c0_20, %c0_21] : memref<16x1xf32, #tpu.memory_space<vmem>>, vector<16x1xf32>
    tpu.vector_store %arg7[%c0_20, %c0_21], %23 {strides = array<i32>} : memref<16x1xf32, #tpu.memory_space<vmem>>, vector<16x1xf32>,
    %c3_i32 = arith.constant 3 : i32
    %36 = arith.cmpi eq, %arg1, %c3_i32 : i32
    %37 = arith.extui %36 : i1 to i32
    %c0_i32_22 = arith.constant 0 : i32
    %38 = arith.cmpi ne, %37, %c0_i32_22 : i32
    scf.if %38 {
      %c1_i32 = arith.constant 1 : i32
      %39 = vector.broadcast %c1_i32 : i32 to vector<16x1xi32>
      %40 = arith.cmpi ne, %6, %39 : vector<16x1xi32>
      %41 = arith.extui %40 : vector<16x1xi1> to vector<16x1xi32>
      %42 = arith.sitofp %41 : vector<16x1xi32> to vector<16x1xf32>
      %c0_23 = arith.constant 0 : index
      %c0_24 = arith.constant 0 : index
      %43 = vector.load %arg7[%c0_23, %c0_24] : memref<16x1xf32, #tpu.memory_space<vmem>>, vector<16x1xf32>
      %c0_25 = arith.constant 0 : index
      %c0_26 = arith.constant 0 : index
      %44 = vector.load %arg8[%c0_25, %c0_26] : memref<16x1xf32, #tpu.memory_space<vmem>>, vector<16x1xf32>
      %45 = math.log %44 : vector<16x1xf32>
      %46 = arith.addf %43, %45 : vector<16x1xf32>
      %c0_27 = arith.constant 0 : index
      %c0_28 = arith.constant 0 : index
      %47 = vector.load %arg9[%c0_27, %c0_28] : memref<16x1xf32, #tpu.memory_space<vmem>>, vector<16x1xf32>
      %48 = arith.subf %46, %47 : vector<16x1xf32>
      %49 = arith.mulf %48, %42 : vector<16x1xf32>
      %50 = vector.shape_cast %49 : vector<16x1xf32> to vector<1x16x1xf32>
      %cst_29 = arith.constant dense<0.000000e+00> : vector<1xf32>
      %51 = vector.multi_reduction <add>, %50, %cst_29 [1, 2] : vector<1x16x1xf32> to vector<1xf32>
      %52 = vector.shape_cast %51 : vector<1xf32> to vector<1x1x1xf32>
      %53 = vector.extract %52[0, 0, 0] : f32 from vector<1x1x1xf32>
      %54 = vector.broadcast %53 : f32 to vector<1x8x128xf32>
      %c0_30 = arith.constant 0 : index
      %c0_31 = arith.constant 0 : index
      %c0_32 = arith.constant 0 : index
      %55 = vector.load %arg5[%c0_30, %c0_31, %c0_32] : memref<1x8x128xf32, #tpu.memory_space<vmem>>, vector<1x8x128xf32>
      tpu.vector_store %arg5[%c0_30, %c0_31, %c0_32], %54 {strides = array<i32>} : memref<1x8x128xf32, #tpu.memory_space<vmem>>, vector<1x8x128xf32>,
      %56 = vector.shape_cast %42 : vector<16x1xf32> to vector<1x16x1xf32>
      %cst_33 = arith.constant dense<0.000000e+00> : vector<1xf32>
      %57 = vector.multi_reduction <add>, %56, %cst_33 [1, 2] : vector<1x16x1xf32> to vector<1xf32>
      %58 = vector.shape_cast %57 : vector<1xf32> to vector<1x1x1xf32>
      %59 = vector.extract %58[0, 0, 0] : f32 from vector<1x1x1xf32>
      %60 = vector.broadcast %59 : f32 to vector<1x8x128xf32>
      %c0_34 = arith.constant 0 : index
      %c0_35 = arith.constant 0 : index
      %c0_36 = arith.constant 0 : index
      %61 = vector.load %arg6[%c0_34, %c0_35, %c0_36] : memref<1x8x128xf32, #tpu.memory_space<vmem>>, vector<1x8x128xf32>
      tpu.vector_store %arg6[%c0_34, %c0_35, %c0_36], %60 {strides = array<i32>} : memref<1x8x128xf32, #tpu.memory_space<vmem>>, vector<1x8x128xf32>,
    } else {
    }
    return
  }
  func.func @transform_0(%arg0: i32, %arg1: i32) -> (i32, i32) {
    %c0_i32 = arith.constant 0 : i32
    %c0_i32_0 = arith.constant 0 : i32
    return %arg0, %c0_i32 : i32, i32
  }
  func.func @transform_1(%arg0: i32, %arg1: i32) -> (i32, i32) {
    %c0_i32 = arith.constant 0 : i32
    %c0_i32_0 = arith.constant 0 : i32
    return %c0_i32, %arg1 : i32, i32
  }
  func.func @transform_2(%arg0: i32, %arg1: i32) -> (i32, i32) {
    %c0_i32 = arith.constant 0 : i32
    %c0_i32_0 = arith.constant 0 : i32
    return %arg0, %c0_i32 : i32, i32
  }
  func.func @transform_3(%arg0: i32, %arg1: i32) -> (i32, i32, i32) {
    %c0_i32 = arith.constant 0 : i32
    %c0_i32_0 = arith.constant 0 : i32
    %c0_i32_1 = arith.constant 0 : i32
    return %arg0, %c0_i32, %c0_i32_0 : i32, i32, i32
  }
  func.func @transform_4(%arg0: i32, %arg1: i32) -> (i32, i32, i32) {
    %c0_i32 = arith.constant 0 : i32
    %c0_i32_0 = arith.constant 0 : i32
    %c0_i32_1 = arith.constant 0 : i32
    return %arg0, %c0_i32, %c0_i32_0 : i32, i32, i32
  }
}

</mosaic_0001>

<llo_original>
// kernel: seq2seq_forward.4
$region0: #{seq2seq_forward.4}
  #allocation0 [shape = 'u32[]', space=smem, size = 0x4, offset = 0x4, fixed_abs, tag = 'smem constant byte address 0x4 - core index']
  #allocation1 [shape = 'u32[144,128]{1,0:T(1,128)}', space=vmem, size = 0x12000, scoped, tag = 'internal scratch']
  %s0 = inlined_call_operand.vmem [shape: s32[2,8], index: 0, kind: input, shape index: {}]
  %s1 = inlined_call_operand.vmem [shape: s32[2,16], index: 1, kind: input, shape index: {}]
  %s2 = inlined_call_operand.vmem [shape: bf16[2,8,64], index: 2, kind: input, shape index: {}]
  %s3 = inlined_call_operand.vmem [shape: bf16[2,16,64], index: 3, kind: input, shape index: {}]
  %s4 = inlined_call_operand.vmem [shape: bf16[2,16,64], index: 4, kind: input, shape index: {}]
  %s5 = inlined_call_operand.vmem [shape: f32[2,8,64], index: 5, kind: output, shape index: {}]
  %s6 = sld [smem:[#allocation0]]
  $region30: #{seq2seq_forward.4} parent=0
    _
  %s8 = ssub.s32 1, %s6
  %s9 = scalar_select 0, %s8, %s6
  // Predicated region
  $region2: #{seq2seq_forward.4} parent=0 // pred_check
    _
  $region3: #{seq2seq_forward.4} parent=0 // pred_check_branch
    %11 = sbr.rel (0) target = $region5
  $region4: #{seq2seq_forward.4} parent=0 // pred_region
    _
  $region5: #{seq2seq_forward.4} parent=0 // pred_fallthru
    _
  // Predicated region
  $region6: #{seq2seq_forward.4} parent=0 // pred_check
    _
  $region7: #{seq2seq_forward.4} parent=0 // pred_check_branch
    %13 = sbr.rel (0) target = $region9
  $region8: #{seq2seq_forward.4} parent=0 // pred_region
    _
  $region9: #{seq2seq_forward.4} parent=0 // pred_fallthru
    _
  // Predicated region
  $region10: #{seq2seq_forward.4} parent=0 // pred_check
    _
  $region11: #{seq2seq_forward.4} parent=0 // pred_check_branch
    %15 = sbr.rel (0) target = $region13
  $region12: #{seq2seq_forward.4} parent=0 // pred_region
    _
  $region13: #{seq2seq_forward.4} parent=0 // pred_fallthru
    _
  // Predicated region
  $region14: #{seq2seq_forward.4} parent=0 // pred_check
    _
  $region15: #{seq2seq_forward.4} parent=0 // pred_check_branch
    %17 = sbr.rel (0) target = $region17
  $region16: #{seq2seq_forward.4} parent=0 // pred_region
    _
  $region17: #{seq2seq_forward.4} parent=0 // pred_fallthru
    _
  // Predicated region
  $region18: #{seq2seq_forward.4} parent=0 // pred_check
    _
  $region19: #{seq2seq_forward.4} parent=0 // pred_check_branch
    %19 = sbr.rel (0) target = $region21
  $region20: #{seq2seq_forward.4} parent=0 // pred_region
    _
  $region21: #{seq2seq_forward.4} parent=0 // pred_fallthru
    _
  %v21 = vld [vmem:[%s2] sm:$0xf]
  %v22 = vld [vmem:[%s2 + $0x4] sm:$0xf]
  %v23 = vld [vmem:[%s3] sm:$0xf]
  %v24 = vld [vmem:[%s3 + $0x4] sm:$0xf]
  %v25 = vld [vmem:[%s3 + $0x8] sm:$0xf]
  %v26 = vld [vmem:[%s3 + $0xc] sm:$0xf]
  %v27 = vld [vmem:[%s4] sm:$0xf]
  %v28 = vld [vmem:[%s4 + $0x4] sm:$0xf]
  %v29 = vld [vmem:[%s4 + $0x8] sm:$0xf]
  %v30 = vld [vmem:[%s4 + $0xc] sm:$0xf]
  %v33 = vunpack.c.l.b16 %v23
  %v34 = vunpack.c.l.b16 %v24
  %v35 = vpack.c.b16 %v34, %v33
  %vm36 = vcmask 523264
  %v38 = vsel %vm36, %v21, 0
  %v41 = vsel %vm36, %v35, 0
  %43 = vmatprep.subr.bf16.mxu0 0
  %44 = vmatpush1.bf16.xpose.msra.mxu0 0
  %45 = vmatprep.subr.bf16.mxu0 0
  %46 = vmatpush1.bf16.xpose.msra.mxu0 0
  %47 = vmatprep.subr.bf16.mxu0 0
  %48 = vmatpush1.bf16.xpose.msra.mxu0 0
  %49 = vmatprep.subr.bf16.mxu0 0
  %50 = vmatpush1.bf16.xpose.msra.mxu0 0
  %51 = vmatprep.subr.bf16.mxu0 0
  %52 = vmatpush1.bf16.xpose.msra.mxu0 0
  %53 = vmatprep.subr.bf16.mxu0 0
  %54 = vmatpush1.bf16.xpose.msra.mxu0 0
  %55 = vmatprep.subr.bf16.mxu0 0
  %56 = vmatpush1.bf16.xpose.msra.mxu0 0
  %57 = vmatprep.subr.bf16.mxu0 0
  %58 = vmatpush1.bf16.xpose.msra.mxu0 %v41
  %59 = vmatprep.subr.bf16.mxu0 0
  %60 = vmatpush2.bf16.xpose.msra.mxu0 0
  %61 = vmatprep.subr.bf16.mxu0 0
  %62 = vmatpush2.bf16.xpose.msra.mxu0 0
  %63 = vmatprep.subr.bf16.mxu0 0
  %64 = vmatpush2.bf16.xpose.msra.mxu0 0
  %65 = vmatprep.subr.bf16.mxu0 0
  %66 = vmatpush2.bf16.xpose.msra.mxu0 0
  %67 = vmatprep.subr.bf16.mxu0 0
  %68 = vmatpush2.bf16.xpose.msra.mxu0 0
  %69 = vmatprep.subr.bf16.mxu0 0
  %70 = vmatpush2.bf16.xpose.msra.mxu0 0
  %71 = vmatprep.subr.bf16.mxu0 0
  %72 = vmatpush2.bf16.xpose.msra.mxu0 0
  %73 = vmatprep.subr.bf16.mxu0 0
  %74 = vmatpush2.bf16.xpose.msra.mxu0 0
  %75 = vmatprep.mubr.bf16.mxu0 0
  %76 = vmatmul.mubr.bf16.gmra.mxu0 %v38
  %v77 = vpop.f32.mrf.mxu0
  %v78 = vadd.f32 0.0, %v77
  %v79 = vpop.f32.mrf.mxu0
  %v80 = vpop.f32.mrf.mxu0
  %v81 = vpop.f32.mrf.mxu0
  %82 = vdwg.mxu0
  %v85 = vunpack.c.l.b16 %v25
  %v86 = vunpack.c.l.b16 %v26
  %v87 = vpack.c.b16 %v86, %v85
  %v89 = vsel %vm36, %v22, 0
  %v92 = vsel %vm36, %v87, 0
  %94 = vmatprep.subr.bf16.mxu0 0
  %95 = vmatpush1.bf16.xpose.msra.mxu0 0
  %96 = vmatprep.subr.bf16.mxu0 0
  %97 = vmatpush1.bf16.xpose.msra.mxu0 0
  %98 = vmatprep.subr.bf16.mxu0 0
  %99 = vmatpush1.bf16.xpose.msra.mxu0 0
  %100 = vmatprep.subr.bf16.mxu0 0
  %101 = vmatpush1.bf16.xpose.msra.mxu0 0
  %102 = vmatprep.subr.bf16.mxu0 0
  %103 = vmatpush1.bf16.xpose.msra.mxu0 0
  %104 = vmatprep.subr.bf16.mxu0 0
  %105 = vmatpush1.bf16.xpose.msra.mxu0 0
  %106 = vmatprep.subr.bf16.mxu0 0
  %107 = vmatpush1.bf16.xpose.msra.mxu0 0
  %108 = vmatprep.subr.bf16.mxu0 0
  %109 = vmatpush1.bf16.xpose.msra.mxu0 %v92
  %110 = vmatprep.subr.bf16.mxu0 0
  %111 = vmatpush2.bf16.xpose.msra.mxu0 0
  %112 = vmatprep.subr.bf16.mxu0 0
  %113 = vmatpush2.bf16.xpose.msra.mxu0 0
  %114 = vmatprep.subr.bf16.mxu0 0
  %115 = vmatpush2.bf16.xpose.msra.mxu0 0
  %116 = vmatprep.subr.bf16.mxu0 0
  %117 = vmatpush2.bf16.xpose.msra.mxu0 0
  %118 = vmatprep.subr.bf16.mxu0 0
  %119 = vmatpush2.bf16.xpose.msra.mxu0 0
  %120 = vmatprep.subr.bf16.mxu0 0
  %121 = vmatpush2.bf16.xpose.msra.mxu0 0
  %122 = vmatprep.subr.bf16.mxu0 0
  %123 = vmatpush2.bf16.xpose.msra.mxu0 0
  %124 = vmatprep.subr.bf16.mxu0 0
  %125 = vmatpush2.bf16.xpose.msra.mxu0 0
  %126 = vmatprep.mubr.bf16.mxu0 0
  %127 = vmatmul.mubr.bf16.gmra.mxu0 %v89
  %v128 = vpop.f32.mrf.mxu0
  %v129 = vadd.f32 0.0, %v128
  %v130 = vpop.f32.mrf.mxu0
  %v131 = vpop.f32.mrf.mxu0
  %v132 = vpop.f32.mrf.mxu0
  %133 = vdwg.mxu0
  %v134 = vmul.f32 %v78, 0.125
  %v135 = vmul.f32 %v129, 0.125
  %v136 = vld [vmem:[%s0] sm:$0x3]
  %v137 = vld [vmem:[%s1] sm:$0x3]
  %v138 = vlaneseq
  %v139 = vshrl.u32 %v138, 7
  %v140 = vsub.s32 0, %v139
  %v141 = vrot.slane %v136, %v140
  %143 = vbcast.lane.b32.xlu0 %v141, 256
  %v144 = vpop.permute.xlu0 %143
  %v145 = vlaneseq
  %v146 = vshrl.u32 %v145, 7
  %v147 = vsub.s32 1, %v146
  %v148 = vrot.slane %v136, %v147
  %150 = vbcast.lane.b32.xlu0 %v148, 256
  %v151 = vpop.permute.xlu0 %150
  %vm152 = vcmp.ne.s32.totalorder %v144, 0
  %vm153 = vcmp.ne.s32.totalorder %v151, 0
  %v155 = vunpack.c.l.s4 1966171168
  %v156 = vunpack.c.0.s8 %v155
  %v157 = vlaneseq
  %v158 = vshrl.u32 %v157, 7
  %v159 = vsub.s32 %v156, %v158
  %v160 = vrot.slane %v137, %v159
  %v161 = vcombine.high %v160, %v160
  %v163 = vunpack.c.l.s4 1966171168
  %v164 = vunpack.c.0.s8 %v163
  %v165 = vlaneseq
  %v166 = vshrl.u32 %v165, 7
  %v167 = vsub.s32 %v164, %v166
  %v168 = vrot.slane %v160, %v167
  %v170 = vunpack.c.l.s4 1966171168
  %v171 = vunpack.c.0.s8 %v170
  %v172 = vlaneseq
  %v173 = vshrl.u32 %v172, 7
  %v174 = vsub.s32 %v171, %v173
  %v175 = vrot.slane %v161, %v174
  %vm176 = vcmp.ne.s32.totalorder %v168, 0
  %vm177 = vcmp.ne.s32.totalorder %v175, 0
  %v178 = vsel %vm152, 1, 0
  %v179 = vsel %vm153, 1, 0
  %vm180 = vcmp.eq.s32.totalorder %v178, 1
  %vm181 = vcmp.eq.s32.totalorder %v179, 1
  %v182 = vsel %vm176, 1, 0
  %v183 = vsel %vm177, 1, 0
  %v184 = vlaneseq
  %v185 = vshrl.u32 %v184, 7
  %v186 = vsub.s32 0, %v185
  %v187 = vrot.slane %v182, %v186
  %v188 = vlaneseq
  %v189 = vshrl.u32 %v188, 7
  %v190 = vsub.s32 0, %v189
  %v191 = vrot.slane %v183, %v190
  %vm192 = vcmp.eq.s32.totalorder %v187, 1
  %vm193 = vcmp.eq.s32.totalorder %v191, 1
  %vm194 = vmand %vm180, %vm192
  %vm195 = vmand %vm181, %vm193
  %v196 = vlaneseq
  %v197 = vshrl.u32 %v196, 7
  %v198 = vadd.s32 %v197, 8
  %v199 = vlaneseq
  %v200 = vand.u32 %v199, 127
  %vm201 = vcmp.le.s32.totalorder %v200, %v198
  %vm202 = vmand %vm194, %vm201
  %vm203 = vmand %vm195, %vm201
  %v204 = vsel %vm202, %v134, -1e+09
  %v205 = vsel %vm203, %v135, -1e+09
  %vm206 = vcmask 130048
  %v207 = vsel %vm206, %v204, -inf
  %208 = vmax.xlane.f32.xlu0 %v207
  %v209 = vpop.xlane.xlu0 %208
  %v210 = vsel %vm206, %v205, -inf
  %211 = vmax.xlane.f32.xlu0 %v210
  %v212 = vpop.xlane.xlu0 %211
  %v213 = vsub.f32 %v204, %v209
  %v214 = vsub.f32 %v205, %v212
  %v215 = vmul.f32 %v213, 1.442695
  %v216 = vpow.pop %v215
  %v217 = vmul.f32 %v214, 1.442695
  %v218 = vpow.pop %v217
  %v219 = vsel %vm206, %v216, 0.0
  %220 = vadd.xlane.f32.xlu0 %v219
  %v221 = vpop.xlane.xlu0 %220
  %v222 = vsel %vm206, %v218, 0.0
  %223 = vadd.xlane.f32.xlu0 %v222
  %v224 = vpop.xlane.xlu0 %223
  %v225 = vrcp.pop %v221
  %v226 = vrcp.pop %v224
  %v227 = vmul.f32 %v216, %v225
  %v228 = vmul.f32 %v218, %v226
  %v229 = vpack.c.bf16 %v227, %v227
  %v230 = vpack.c.bf16 %v228, %v228
  %v233 = vunpack.c.l.b16 %v27
  %v234 = vunpack.c.l.b16 %v28
  %v235 = vpack.c.b16 %v234, %v233
  %v238 = vsel %vm206, %v229, 0
  %240 = vmatprep.subr.bf16.mxu0 0
  %241 = vmatpush1.bf16.msra.mxu0 0
  %242 = vmatprep.subr.bf16.mxu0 0
  %243 = vmatpush1.bf16.msra.mxu0 0
  %244 = vmatprep.subr.bf16.mxu0 0
  %245 = vmatpush1.bf16.msra.mxu0 0
  %246 = vmatprep.subr.bf16.mxu0 0
  %247 = vmatpush1.bf16.msra.mxu0 0
  %248 = vmatprep.subr.bf16.mxu0 0
  %249 = vmatpush1.bf16.msra.mxu0 0
  %250 = vmatprep.subr.bf16.mxu0 0
  %251 = vmatpush1.bf16.msra.mxu0 0
  %252 = vmatprep.subr.bf16.mxu0 0
  %253 = vmatpush1.bf16.msra.mxu0 0
  %254 = vmatprep.subr.bf16.mxu0 0
  %255 = vmatpush1.bf16.msra.mxu0 %v235
  %256 = vmatprep.subr.bf16.mxu0 0
  %257 = vmatpush2.bf16.msra.mxu0 0
  %258 = vmatprep.subr.bf16.mxu0 0
  %259 = vmatpush2.bf16.msra.mxu0 0
  %260 = vmatprep.subr.bf16.mxu0 0
  %261 = vmatpush2.bf16.msra.mxu0 0
  %262 = vmatprep.subr.bf16.mxu0 0
  %263 = vmatpush2.bf16.msra.mxu0 0
  %264 = vmatprep.subr.bf16.mxu0 0
  %265 = vmatpush2.bf16.msra.mxu0 0
  %266 = vmatprep.subr.bf16.mxu0 0
  %267 = vmatpush2.bf16.msra.mxu0 0
  %268 = vmatprep.subr.bf16.mxu0 0
  %269 = vmatpush2.bf16.msra.mxu0 0
  %270 = vmatprep.subr.bf16.mxu0 0
  %271 = vmatpush2.bf16.msra.mxu0 0
  %272 = vmatprep.mubr.bf16.mxu0 0
  %273 = vmatmul.mubr.bf16.gmra.mxu0 %v238
  %v274 = vpop.f32.mrf.mxu0
  %v275 = vadd.f32 0.0, %v274
  %v276 = vpop.f32.mrf.mxu0
  %v277 = vpop.f32.mrf.mxu0
  %v278 = vpop.f32.mrf.mxu0
  %279 = vdwg.mxu0
  %v282 = vunpack.c.l.b16 %v29
  %v283 = vunpack.c.l.b16 %v30
  %v284 = vpack.c.b16 %v283, %v282
  %v287 = vsel %vm206, %v230, 0
  %289 = vmatprep.subr.bf16.mxu0 0
  %290 = vmatpush1.bf16.msra.mxu0 0
  %291 = vmatprep.subr.bf16.mxu0 0
  %292 = vmatpush1.bf16.msra.mxu0 0
  %293 = vmatprep.subr.bf16.mxu0 0
  %294 = vmatpush1.bf16.msra.mxu0 0
  %295 = vmatprep.subr.bf16.mxu0 0
  %296 = vmatpush1.bf16.msra.mxu0 0
  %297 = vmatprep.subr.bf16.mxu0 0
  %298 = vmatpush1.bf16.msra.mxu0 0
  %299 = vmatprep.subr.bf16.mxu0 0
  %300 = vmatpush1.bf16.msra.mxu0 0
  %301 = vmatprep.subr.bf16.mxu0 0
  %302 = vmatpush1.bf16.msra.mxu0 0
  %303 = vmatprep.subr.bf16.mxu0 0
  %304 = vmatpush1.bf16.msra.mxu0 %v284
  %305 = vmatprep.subr.bf16.mxu0 0
  %306 = vmatpush2.bf16.msra.mxu0 0
  %307 = vmatprep.subr.bf16.mxu0 0
  %308 = vmatpush2.bf16.msra.mxu0 0
  %309 = vmatprep.subr.bf16.mxu0 0
  %310 = vmatpush2.bf16.msra.mxu0 0
  %311 = vmatprep.subr.bf16.mxu0 0
  %312 = vmatpush2.bf16.msra.mxu0 0
  %313 = vmatprep.subr.bf16.mxu0 0
  %314 = vmatpush2.bf16.msra.mxu0 0
  %315 = vmatprep.subr.bf16.mxu0 0
  %316 = vmatpush2.bf16.msra.mxu0 0
  %317 = vmatprep.subr.bf16.mxu0 0
  %318 = vmatpush2.bf16.msra.mxu0 0
  %319 = vmatprep.subr.bf16.mxu0 0
  %320 = vmatpush2.bf16.msra.mxu0 0
  %321 = vmatprep.mubr.bf16.mxu0 0
  %322 = vmatmul.mubr.bf16.gmra.mxu0 %v287
  %v323 = vpop.f32.mrf.mxu0
  %v324 = vadd.f32 0.0, %v323
  %v325 = vpop.f32.mrf.mxu0
  %v326 = vpop.f32.mrf.mxu0
  %v327 = vpop.f32.mrf.mxu0
  %328 = vdwg.mxu0
  %329 = vst.msk [vmem:[%s5] sm:$0xff] %vm36, %v275
  %330 = vst.msk [vmem:[%s5 + $0x8] sm:$0xff] %vm36, %v324
  // Predicated region
  $region22: #{seq2seq_forward.4} parent=0 // pred_check
    _
  $region23: #{seq2seq_forward.4} parent=0 // pred_check_branch
    %332 = sbr.rel (0) target = $region25
  $region24: #{seq2seq_forward.4} parent=0 // pred_region
    _
  $region25: #{seq2seq_forward.4} parent=0 // pred_fallthru
    _
  // Predicated region
  $region26: #{seq2seq_forward.4} parent=0 // pred_check
    _
  $region27: #{seq2seq_forward.4} parent=0 // pred_check_branch
    %334 = sbr.rel (0) target = $region29
  $region28: #{seq2seq_forward.4} parent=0 // pred_region
    _
  $region29: #{seq2seq_forward.4} parent=0 // pred_fallthru
    _

// kernel: seq2seq_forward.3
$region0: #{seq2seq_forward.3}
  #allocation0 [shape = 'u32[]', space=smem, size = 0x4, offset = 0x4, fixed_abs, tag = 'smem constant byte address 0x4 - core index']
  #allocation1 [shape = 'u32[144,128]{1,0:T(1,128)}', space=vmem, size = 0x12000, scoped, tag = 'internal scratch']
  %s0 = inlined_call_operand.vmem [shape: s32[2,8], index: 0, kind: input, shape index: {}, may-alias: {0,1}]
  %s1 = inlined_call_operand.vmem [shape: s32[2,8], index: 1, kind: input, shape index: {}, may-alias: {0,1}]
  %s2 = inlined_call_operand.vmem [shape: bf16[2,8,64], index: 2, kind: input, shape index: {}]
  %s3 = inlined_call_operand.vmem [shape: bf16[2,8,64], index: 3, kind: input, shape index: {}]
  %s4 = inlined_call_operand.vmem [shape: bf16[2,8,64], index: 4, kind: input, shape index: {}]
  %s5 = inlined_call_operand.vmem [shape: f32[2,8,64], index: 5, kind: output, shape index: {}]
  %s6 = sld [smem:[#allocation0]]
  $region30: #{seq2seq_forward.3} parent=0
    _
  %s8 = ssub.s32 1, %s6
  %s9 = scalar_select 0, %s8, %s6
  // Predicated region
  $region2: #{seq2seq_forward.3} parent=0 // pred_check
    _
  $region3: #{seq2seq_forward.3} parent=0 // pred_check_branch
    %11 = sbr.rel (0) target = $region5
  $region4: #{seq2seq_forward.3} parent=0 // pred_region
    _
  $region5: #{seq2seq_forward.3} parent=0 // pred_fallthru
    _
  // Predicated region
  $region6: #{seq2seq_forward.3} parent=0 // pred_check
    _
  $region7: #{seq2seq_forward.3} parent=0 // pred_check_branch
    %13 = sbr.rel (0) target = $region9
  $region8: #{seq2seq_forward.3} parent=0 // pred_region
    _
  $region9: #{seq2seq_forward.3} parent=0 // pred_fallthru
    _
  // Predicated region
  $region10: #{seq2seq_forward.3} parent=0 // pred_check
    _
  $region11: #{seq2seq_forward.3} parent=0 // pred_check_branch
    %15 = sbr.rel (0) target = $region13
  $region12: #{seq2seq_forward.3} parent=0 // pred_region
    _
  $region13: #{seq2seq_forward.3} parent=0 // pred_fallthru
    _
  // Predicated region
  $region14: #{seq2seq_forward.3} parent=0 // pred_check
    _
  $region15: #{seq2seq_forward.3} parent=0 // pred_check_branch
    %17 = sbr.rel (0) target = $region17
  $region16: #{seq2seq_forward.3} parent=0 // pred_region
    _
  $region17: #{seq2seq_forward.3} parent=0 // pred_fallthru
    _
  // Predicated region
  $region18: #{seq2seq_forward.3} parent=0 // pred_check
    _
  $region19: #{seq2seq_forward.3} parent=0 // pred_check_branch
    %19 = sbr.rel (0) target = $region21
  $region20: #{seq2seq_forward.3} parent=0 // pred_region
    _
  $region21: #{seq2seq_forward.3} parent=0 // pred_fallthru
    _
  %v21 = vld [vmem:[%s2] sm:$0xf]
  %v22 = vld [vmem:[%s2 + $0x4] sm:$0xf]
  %v23 = vld [vmem:[%s3] sm:$0xf]
  %v24 = vld [vmem:[%s3 + $0x4] sm:$0xf]
  %v25 = vld [vmem:[%s4] sm:$0xf]
  %v26 = vld [vmem:[%s4 + $0x4] sm:$0xf]
  %vm27 = vcmask 523264
  %v29 = vsel %vm27, %v21, 0
  %v32 = vsel %vm27, %v23, 0
  %34 = vmatprep.subr.bf16.mxu0 0
  %35 = vmatpush1.bf16.xpose.msra.mxu0 0
  %36 = vmatprep.subr.bf16.mxu0 0
  %37 = vmatpush1.bf16.xpose.msra.mxu0 0
  %38 = vmatprep.subr.bf16.mxu0 0
  %39 = vmatpush1.bf16.xpose.msra.mxu0 0
  %40 = vmatprep.subr.bf16.mxu0 0
  %41 = vmatpush1.bf16.xpose.msra.mxu0 0
  %42 = vmatprep.subr.bf16.mxu0 0
  %43 = vmatpush1.bf16.xpose.msra.mxu0 0
  %44 = vmatprep.subr.bf16.mxu0 0
  %45 = vmatpush1.bf16.xpose.msra.mxu0 0
  %46 = vmatprep.subr.bf16.mxu0 0
  %47 = vmatpush1.bf16.xpose.msra.mxu0 0
  %48 = vmatprep.subr.bf16.mxu0 0
  %49 = vmatpush1.bf16.xpose.msra.mxu0 %v32
  %50 = vmatprep.subr.bf16.mxu0 0
  %51 = vmatpush2.bf16.xpose.msra.mxu0 0
  %52 = vmatprep.subr.bf16.mxu0 0
  %53 = vmatpush2.bf16.xpose.msra.mxu0 0
  %54 = vmatprep.subr.bf16.mxu0 0
  %55 = vmatpush2.bf16.xpose.msra.mxu0 0
  %56 = vmatprep.subr.bf16.mxu0 0
  %57 = vmatpush2.bf16.xpose.msra.mxu0 0
  %58 = vmatprep.subr.bf16.mxu0 0
  %59 = vmatpush2.bf16.xpose.msra.mxu0 0
  %60 = vmatprep.subr.bf16.mxu0 0
  %61 = vmatpush2.bf16.xpose.msra.mxu0 0
  %62 = vmatprep.subr.bf16.mxu0 0
  %63 = vmatpush2.bf16.xpose.msra.mxu0 0
  %64 = vmatprep.subr.bf16.mxu0 0
  %65 = vmatpush2.bf16.xpose.msra.mxu0 0
  %66 = vmatprep.mubr.bf16.mxu0 0
  %67 = vmatmul.mubr.bf16.gmra.mxu0 %v29
  %v68 = vpop.f32.mrf.mxu0
  %v69 = vadd.f32 0.0, %v68
  %v70 = vpop.f32.mrf.mxu0
  %v71 = vpop.f32.mrf.mxu0
  %v72 = vpop.f32.mrf.mxu0
  %73 = vdwg.mxu0
  %v75 = vsel %vm27, %v22, 0
  %v78 = vsel %vm27, %v24, 0
  %80 = vmatprep.subr.bf16.mxu0 0
  %81 = vmatpush1.bf16.xpose.msra.mxu0 0
  %82 = vmatprep.subr.bf16.mxu0 0
  %83 = vmatpush1.bf16.xpose.msra.mxu0 0
  %84 = vmatprep.subr.bf16.mxu0 0
  %85 = vmatpush1.bf16.xpose.msra.mxu0 0
  %86 = vmatprep.subr.bf16.mxu0 0
  %87 = vmatpush1.bf16.xpose.msra.mxu0 0
  %88 = vmatprep.subr.bf16.mxu0 0
  %89 = vmatpush1.bf16.xpose.msra.mxu0 0
  %90 = vmatprep.subr.bf16.mxu0 0
  %91 = vmatpush1.bf16.xpose.msra.mxu0 0
  %92 = vmatprep.subr.bf16.mxu0 0
  %93 = vmatpush1.bf16.xpose.msra.mxu0 0
  %94 = vmatprep.subr.bf16.mxu0 0
  %95 = vmatpush1.bf16.xpose.msra.mxu0 %v78
  %96 = vmatprep.subr.bf16.mxu0 0
  %97 = vmatpush2.bf16.xpose.msra.mxu0 0
  %98 = vmatprep.subr.bf16.mxu0 0
  %99 = vmatpush2.bf16.xpose.msra.mxu0 0
  %100 = vmatprep.subr.bf16.mxu0 0
  %101 = vmatpush2.bf16.xpose.msra.mxu0 0
  %102 = vmatprep.subr.bf16.mxu0 0
  %103 = vmatpush2.bf16.xpose.msra.mxu0 0
  %104 = vmatprep.subr.bf16.mxu0 0
  %105 = vmatpush2.bf16.xpose.msra.mxu0 0
  %106 = vmatprep.subr.bf16.mxu0 0
  %107 = vmatpush2.bf16.xpose.msra.mxu0 0
  %108 = vmatprep.subr.bf16.mxu0 0
  %109 = vmatpush2.bf16.xpose.msra.mxu0 0
  %110 = vmatprep.subr.bf16.mxu0 0
  %111 = vmatpush2.bf16.xpose.msra.mxu0 0
  %112 = vmatprep.mubr.bf16.mxu0 0
  %113 = vmatmul.mubr.bf16.gmra.mxu0 %v75
  %v114 = vpop.f32.mrf.mxu0
  %v115 = vadd.f32 0.0, %v114
  %v116 = vpop.f32.mrf.mxu0
  %v117 = vpop.f32.mrf.mxu0
  %v118 = vpop.f32.mrf.mxu0
  %119 = vdwg.mxu0
  %v120 = vmul.f32 %v69, 0.125
  %v121 = vmul.f32 %v115, 0.125
  %v122 = vld [vmem:[%s0] sm:$0x3]
  %v123 = vld [vmem:[%s1] sm:$0x3]
  %v124 = vlaneseq
  %v125 = vshrl.u32 %v124, 7
  %v126 = vsub.s32 0, %v125
  %v127 = vrot.slane %v122, %v126
  %129 = vbcast.lane.b32.xlu0 %v127, 256
  %v130 = vpop.permute.xlu0 %129
  %v131 = vlaneseq
  %v132 = vshrl.u32 %v131, 7
  %v133 = vsub.s32 1, %v132
  %v134 = vrot.slane %v122, %v133
  %136 = vbcast.lane.b32.xlu0 %v134, 256
  %v137 = vpop.permute.xlu0 %136
  %vm138 = vcmp.ne.s32.totalorder %v130, 0
  %vm139 = vcmp.ne.s32.totalorder %v137, 0
  %v141 = vunpack.c.l.s4 1966171168
  %v142 = vunpack.c.0.s8 %v141
  %v143 = vlaneseq
  %v144 = vshrl.u32 %v143, 7
  %v145 = vsub.s32 %v142, %v144
  %v146 = vrot.slane %v123, %v145
  %v147 = vcombine.high %v146, %v146
  %v149 = vunpack.c.l.s4 1966171168
  %v150 = vunpack.c.0.s8 %v149
  %v151 = vlaneseq
  %v152 = vshrl.u32 %v151, 7
  %v153 = vsub.s32 %v150, %v152
  %v154 = vrot.slane %v146, %v153
  %v156 = vunpack.c.l.s4 1966171168
  %v157 = vunpack.c.0.s8 %v156
  %v158 = vlaneseq
  %v159 = vshrl.u32 %v158, 7
  %v160 = vsub.s32 %v157, %v159
  %v161 = vrot.slane %v147, %v160
  %vm162 = vcmp.ne.s32.totalorder %v154, 0
  %vm163 = vcmp.ne.s32.totalorder %v161, 0
  %v164 = vsel %vm138, 1, 0
  %v165 = vsel %vm139, 1, 0
  %vm166 = vcmp.eq.s32.totalorder %v164, 1
  %vm167 = vcmp.eq.s32.totalorder %v165, 1
  %v168 = vsel %vm162, 1, 0
  %v169 = vsel %vm163, 1, 0
  %v170 = vlaneseq
  %v171 = vshrl.u32 %v170, 7
  %v172 = vsub.s32 0, %v171
  %v173 = vrot.slane %v168, %v172
  %v174 = vlaneseq
  %v175 = vshrl.u32 %v174, 7
  %v176 = vsub.s32 0, %v175
  %v177 = vrot.slane %v169, %v176
  %vm178 = vcmp.eq.s32.totalorder %v173, 1
  %vm179 = vcmp.eq.s32.totalorder %v177, 1
  %vm180 = vmand %vm166, %vm178
  %vm181 = vmand %vm167, %vm179
  %v182 = vsel %vm180, %v120, -1e+09
  %v183 = vsel %vm181, %v121, -1e+09
  %vm184 = vcmask 64512
  %v185 = vsel %vm184, %v182, -inf
  %186 = vmax.xlane.f32.xlu0 %v185
  %v187 = vpop.xlane.xlu0 %186
  %v188 = vsel %vm184, %v183, -inf
  %189 = vmax.xlane.f32.xlu0 %v188
  %v190 = vpop.xlane.xlu0 %189
  %v191 = vsub.f32 %v182, %v187
  %v192 = vsub.f32 %v183, %v190
  %v193 = vmul.f32 %v191, 1.442695
  %v194 = vpow.pop %v193
  %v195 = vmul.f32 %v192, 1.442695
  %v196 = vpow.pop %v195
  %v197 = vsel %vm184, %v194, 0.0
  %198 = vadd.xlane.f32.xlu0 %v197
  %v199 = vpop.xlane.xlu0 %198
  %v200 = vsel %vm184, %v196, 0.0
  %201 = vadd.xlane.f32.xlu0 %v200
  %v202 = vpop.xlane.xlu0 %201
  %v203 = vrcp.pop %v199
  %v204 = vrcp.pop %v202
  %v205 = vmul.f32 %v194, %v203
  %v206 = vmul.f32 %v196, %v204
  %v207 = vpack.c.bf16 %v205, %v205
  %v208 = vpack.c.bf16 %v206, %v206
  %v210 = vsel %vm184, %v207, 0
  %vm212 = vcmask 1043456
  %v214 = vsel %vm212, %v25, 0
  %216 = vmatprep.subr.bf16.mxu0 0
  %217 = vmatpush1.bf16.msra.mxu0 0
  %218 = vmatprep.subr.bf16.mxu0 0
  %219 = vmatpush1.bf16.msra.mxu0 0
  %220 = vmatprep.subr.bf16.mxu0 0
  %221 = vmatpush1.bf16.msra.mxu0 0
  %222 = vmatprep.subr.bf16.mxu0 0
  %223 = vmatpush1.bf16.msra.mxu0 0
  %224 = vmatprep.subr.bf16.mxu0 0
  %225 = vmatpush1.bf16.msra.mxu0 0
  %226 = vmatprep.subr.bf16.mxu0 0
  %227 = vmatpush1.bf16.msra.mxu0 0
  %228 = vmatprep.subr.bf16.mxu0 0
  %229 = vmatpush1.bf16.msra.mxu0 0
  %230 = vmatprep.subr.bf16.mxu0 0
  %231 = vmatpush1.bf16.msra.mxu0 %v214
  %232 = vmatprep.subr.bf16.mxu0 0
  %233 = vmatpush2.bf16.msra.mxu0 0
  %234 = vmatprep.subr.bf16.mxu0 0
  %235 = vmatpush2.bf16.msra.mxu0 0
  %236 = vmatprep.subr.bf16.mxu0 0
  %237 = vmatpush2.bf16.msra.mxu0 0
  %238 = vmatprep.subr.bf16.mxu0 0
  %239 = vmatpush2.bf16.msra.mxu0 0
  %240 = vmatprep.subr.bf16.mxu0 0
  %241 = vmatpush2.bf16.msra.mxu0 0
  %242 = vmatprep.subr.bf16.mxu0 0
  %243 = vmatpush2.bf16.msra.mxu0 0
  %244 = vmatprep.subr.bf16.mxu0 0
  %245 = vmatpush2.bf16.msra.mxu0 0
  %246 = vmatprep.subr.bf16.mxu0 0
  %247 = vmatpush2.bf16.msra.mxu0 0
  %248 = vmatprep.mubr.bf16.mxu0 0
  %249 = vmatmul.mubr.bf16.gmra.mxu0 %v210
  %v250 = vpop.f32.mrf.mxu0
  %v251 = vadd.f32 0.0, %v250
  %v252 = vpop.f32.mrf.mxu0
  %v253 = vpop.f32.mrf.mxu0
  %v254 = vpop.f32.mrf.mxu0
  %255 = vdwg.mxu0
  %v257 = vsel %vm184, %v208, 0
  %v260 = vsel %vm212, %v26, 0
  %262 = vmatprep.subr.bf16.mxu0 0
  %263 = vmatpush1.bf16.msra.mxu0 0
  %264 = vmatprep.subr.bf16.mxu0 0
  %265 = vmatpush1.bf16.msra.mxu0 0
  %266 = vmatprep.subr.bf16.mxu0 0
  %267 = vmatpush1.bf16.msra.mxu0 0
  %268 = vmatprep.subr.bf16.mxu0 0
  %269 = vmatpush1.bf16.msra.mxu0 0
  %270 = vmatprep.subr.bf16.mxu0 0
  %271 = vmatpush1.bf16.msra.mxu0 0
  %272 = vmatprep.subr.bf16.mxu0 0
  %273 = vmatpush1.bf16.msra.mxu0 0
  %274 = vmatprep.subr.bf16.mxu0 0
  %275 = vmatpush1.bf16.msra.mxu0 0
  %276 = vmatprep.subr.bf16.mxu0 0
  %277 = vmatpush1.bf16.msra.mxu0 %v260
  %278 = vmatprep.subr.bf16.mxu0 0
  %279 = vmatpush2.bf16.msra.mxu0 0
  %280 = vmatprep.subr.bf16.mxu0 0
  %281 = vmatpush2.bf16.msra.mxu0 0
  %282 = vmatprep.subr.bf16.mxu0 0
  %283 = vmatpush2.bf16.msra.mxu0 0
  %284 = vmatprep.subr.bf16.mxu0 0
  %285 = vmatpush2.bf16.msra.mxu0 0
  %286 = vmatprep.subr.bf16.mxu0 0
  %287 = vmatpush2.bf16.msra.mxu0 0
  %288 = vmatprep.subr.bf16.mxu0 0
  %289 = vmatpush2.bf16.msra.mxu0 0
  %290 = vmatprep.subr.bf16.mxu0 0
  %291 = vmatpush2.bf16.msra.mxu0 0
  %292 = vmatprep.subr.bf16.mxu0 0
  %293 = vmatpush2.bf16.msra.mxu0 0
  %294 = vmatprep.mubr.bf16.mxu0 0
  %295 = vmatmul.mubr.bf16.gmra.mxu0 %v257
  %v296 = vpop.f32.mrf.mxu0
  %v297 = vadd.f32 0.0, %v296
  %v298 = vpop.f32.mrf.mxu0
  %v299 = vpop.f32.mrf.mxu0
  %v300 = vpop.f32.mrf.mxu0
  %301 = vdwg.mxu0
  %302 = vst.msk [vmem:[%s5] sm:$0xff] %vm27, %v251
  %303 = vst.msk [vmem:[%s5 + $0x8] sm:$0xff] %vm27, %v297
  // Predicated region
  $region22: #{seq2seq_forward.3} parent=0 // pred_check
    _
  $region23: #{seq2seq_forward.3} parent=0 // pred_check_branch
    %305 = sbr.rel (0) target = $region25
  $region24: #{seq2seq_forward.3} parent=0 // pred_region
    _
  $region25: #{seq2seq_forward.3} parent=0 // pred_fallthru
    _
  // Predicated region
  $region26: #{seq2seq_forward.3} parent=0 // pred_check
    _
  $region27: #{seq2seq_forward.3} parent=0 // pred_check_branch
    %307 = sbr.rel (0) target = $region29
  $region28: #{seq2seq_forward.3} parent=0 // pred_region
    _
  $region29: #{seq2seq_forward.3} parent=0 // pred_fallthru
    _

// kernel: seq2seq_forward.5
$region0: #{seq2seq_forward.5}
  #allocation0 [shape = 'u32[]', space=smem, size = 0x4, offset = 0x4, fixed_abs, tag = 'smem constant byte address 0x4 - core index']
  #allocation1 [shape = 'u32[144,128]{1,0:T(1,128)}', space=vmem, size = 0x12000, scoped, tag = 'internal scratch']
  #allocation2 [shape = 'f32[16,1]{1,0:T(8,128)}', space=vmem, size = 0x2000, scoped, tag = 'scratch operand']
  #allocation3 [shape = 'f32[16,1]{1,0:T(8,128)}', space=vmem, size = 0x2000, scoped, tag = 'scratch operand']
  #allocation4 [shape = 'f32[16,1]{1,0:T(8,128)}', space=vmem, size = 0x2000, scoped, tag = 'scratch operand']
  %s0 = inlined_call_operand.vmem [shape: bf16[16,64], index: 0, kind: input, shape index: {}]
  %s1 = inlined_call_operand.vmem [shape: bf16[64,512], index: 1, kind: input, shape index: {}]
  %s2 = inlined_call_operand.vmem [shape: s32[16,1], index: 2, kind: input, shape index: {}]
  %s3 = inlined_call_operand.vmem [shape: f32[1,8,128], index: 3, kind: output, shape index: {0}]
  %s4 = inlined_call_operand.vmem [shape: f32[1,8,128], index: 4, kind: output, shape index: {1}]
  %5 = xla_tuple %s3, %s4
  %s6 = sld [smem:[#allocation0]]
  $region102: #{seq2seq_forward.5} parent=0
    _
  %s8 = ssub.s32 1, %s6
  %s9 = scalar_select 0, %s8, %s6
  $region1: #{seq2seq_forward.5} parent=0
    #allocation5 [shape = 'u8[32768]{0}', space=vmem, size = 0x8000, scoped, tag = 'input window, operand 1']
    loop: start=0, step=1, limit=6
    $region2: #{seq2seq_forward.5} parent=1 // loop_pre_header
      _
    $region3: #{seq2seq_forward.5} parent=1 // loop_header
      %s11 = sphi 0, %s15
      %p12 = scmp.ge.s32.totalorder %s11, 6
      %s18 = sphi 0, %s30
      %s19 = sphi 0, %s26
      %s20 = sphi 0, %s18
      %s21 = sphi 0, %s19
      %s22 = sphi 0, %s20
      %s23 = sphi 0, %s21
      %s33 = sphi 0, %s35
      %s36 = sphi 0, %s33
      %s37 = sphi 0, %s36
      %s53 = sphi 0, %s37
      %s59 = sphi 0, %s61
      %s62 = sphi 0, %s59
      %s63 = sphi 0, %s62
      %s79 = sphi 0, %s63
      %s85 = sphi 0, %s87
      %s88 = sphi 0, %s85
      %s89 = sphi 0, %s88
      %s105 = sphi 0, %s89
      %s111 = sphi 0, %s113
      %s114 = sphi 0, %s111
      %s115 = sphi 0, %s114
      %s131 = sphi 0, %s115
      %s137 = sphi 0, %s139
      %s140 = sphi 0, %s137
      %s141 = sphi 0, %s140
      %s157 = sphi 0, %s141
    $region4: #{seq2seq_forward.5} parent=1 // loop_header_branch
      %14 = sbr.rel (%p12) target = $region8
    $region5: #{seq2seq_forward.5} parent=1 // loop_body
      %s16 = ssub.s32 %s11, 1
      %s17 = ssub.s32 %s11, 2
      %s24 = sadd.s32 1, %s19
      %p25 = scmp.ge.s32.totalorder %s24, 4
      %s26 = scalar_select %p25, 0, %s24
      %s27 = sadd.s32 1, %s18
      %s28 = scalar_select %p25, %s27, %s18
      %p29 = scmp.ge.s32.totalorder %s28, 1
      %s30 = scalar_select %p29, 0, %s28
      %s31 = ssub.s32 %s18, %s30
      %p32 = scmp.eq.s32.totalorder %s31, 0
      %s34 = sadd.s32 %s33, 1
      %s35 = scalar_select %p32, %s33, %s34
      %p38 = pneg %p32
      %p39 = scmp.eq.s32.totalorder %s11, 3
      %p40 = por %p38, %p39
      %p41 = scmp.ne.s32.totalorder %s33, %s36
      %p42 = scmp.eq.s32.totalorder %s11, 0
      %p43 = por %p41, %p42
      %p44 = scmp.ne.s32.totalorder %s33, %s36
      %p45 = scmp.eq.s32.totalorder %s16, 3
      %p46 = por %p44, %p45
      %p47 = scmp.ne.s32.totalorder %s36, %s37
      %p48 = scmp.eq.s32.totalorder %s16, 0
      %p49 = por %p47, %p48
      %p50 = scmp.ne.s32.totalorder %s36, %s37
      %p51 = scmp.eq.s32.totalorder %s17, 3
      %p52 = por %p50, %p51
      %p54 = scmp.ne.s32.totalorder %s37, %s53
      %p55 = scmp.eq.s32.totalorder %s17, 0
      %p56 = por %p54, %p55
      %s57 = ssub.s32 %s19, %s26
      %p58 = scmp.eq.s32.totalorder %s57, 0
      %s60 = sadd.s32 %s59, 1
      %s61 = scalar_select %p58, %s59, %s60
      %p64 = pneg %p58
      %p65 = scmp.eq.s32.totalorder %s11, 3
      %p66 = por %p64, %p65
      %p67 = scmp.ne.s32.totalorder %s59, %s62
      %p68 = scmp.eq.s32.totalorder %s11, 0
      %p69 = por %p67, %p68
      %p70 = scmp.ne.s32.totalorder %s59, %s62
      %p71 = scmp.eq.s32.totalorder %s16, 3
      %p72 = por %p70, %p71
      %p73 = scmp.ne.s32.totalorder %s62, %s63
      %p74 = scmp.eq.s32.totalorder %s16, 0
      %p75 = por %p73, %p74
      %p76 = scmp.ne.s32.totalorder %s62, %s63
      %p77 = scmp.eq.s32.totalorder %s17, 3
      %p78 = por %p76, %p77
      %p80 = scmp.ne.s32.totalorder %s63, %s79
      %p81 = scmp.eq.s32.totalorder %s17, 0
      %p82 = por %p80, %p81
      %s83 = ssub.s32 %s18, %s30
      %p84 = scmp.eq.s32.totalorder %s83, 0
      %s86 = sadd.s32 %s85, 1
      %s87 = scalar_select %p84, %s85, %s86
      %p90 = pneg %p84
      %p91 = scmp.eq.s32.totalorder %s11, 3
      %p92 = por %p90, %p91
      %p93 = scmp.ne.s32.totalorder %s85, %s88
      %p94 = scmp.eq.s32.totalorder %s11, 0
      %p95 = por %p93, %p94
      %p96 = scmp.ne.s32.totalorder %s85, %s88
      %p97 = scmp.eq.s32.totalorder %s16, 3
      %p98 = por %p96, %p97
      %p99 = scmp.ne.s32.totalorder %s88, %s89
      %p100 = scmp.eq.s32.totalorder %s16, 0
      %p101 = por %p99, %p100
      %p102 = scmp.ne.s32.totalorder %s88, %s89
      %p103 = scmp.eq.s32.totalorder %s17, 3
      %p104 = por %p102, %p103
      %p106 = scmp.ne.s32.totalorder %s89, %s105
      %p107 = scmp.eq.s32.totalorder %s17, 0
      %p108 = por %p106, %p107
      %s109 = ssub.s32 %s18, %s30
      %p110 = scmp.eq.s32.totalorder %s109, 0
      %s112 = sadd.s32 %s111, 1
      %s113 = scalar_select %p110, %s111, %s112
      %p116 = pneg %p110
      %p117 = scmp.eq.s32.totalorder %s11, 3
      %p118 = por %p116, %p117
      %p119 = scmp.ne.s32.totalorder %s111, %s114
      %p120 = scmp.eq.s32.totalorder %s11, 0
      %p121 = por %p119, %p120
      %p122 = scmp.ne.s32.totalorder %s111, %s114
      %p123 = scmp.eq.s32.totalorder %s16, 3
      %p124 = por %p122, %p123
      %p125 = scmp.ne.s32.totalorder %s114, %s115
      %p126 = scmp.eq.s32.totalorder %s16, 0
      %p127 = por %p125, %p126
      %p128 = scmp.ne.s32.totalorder %s114, %s115
      %p129 = scmp.eq.s32.totalorder %s17, 3
      %p130 = por %p128, %p129
      %p132 = scmp.ne.s32.totalorder %s115, %s131
      %p133 = scmp.eq.s32.totalorder %s17, 0
      %p134 = por %p132, %p133
      %s135 = ssub.s32 %s18, %s30
      %p136 = scmp.eq.s32.totalorder %s135, 0
      %s138 = sadd.s32 %s137, 1
      %s139 = scalar_select %p136, %s137, %s138
      %p142 = pneg %p136
      %p143 = scmp.eq.s32.totalorder %s11, 3
      %p144 = por %p142, %p143
      %p145 = scmp.ne.s32.totalorder %s137, %s140
      %p146 = scmp.eq.s32.totalorder %s11, 0
      %p147 = por %p145, %p146
      %p148 = scmp.ne.s32.totalorder %s137, %s140
      %p149 = scmp.eq.s32.totalorder %s16, 3
      %p150 = por %p148, %p149
      %p151 = scmp.ne.s32.totalorder %s140, %s141
      %p152 = scmp.eq.s32.totalorder %s16, 0
      %p153 = por %p151, %p152
      %p154 = scmp.ne.s32.totalorder %s140, %s141
      %p155 = scmp.eq.s32.totalorder %s17, 3
      %p156 = por %p154, %p155
      %p158 = scmp.ne.s32.totalorder %s141, %s157
      %p159 = scmp.eq.s32.totalorder %s17, 0
      %p160 = por %p158, %p159
      %p161 = scmp.le.s32.totalorder 1, %s11
      %p162 = scmp.lt.s32.totalorder %s11, 5
      %p163 = pnand %p161, %p162
      %p164 = pneg %p163
      // Predicated region
      $region9: #{seq2seq_forward.5} parent=5 // pred_check
        _
      $region10: #{seq2seq_forward.5} parent=5 // pred_check_branch
        %166 = sbr.rel (%p163) target = $region12
      $region11: #{seq2seq_forward.5} parent=5 // pred_region
        %s167 = ssub.s32 %s11, 1
        // Predicated region
        $region13: #{seq2seq_forward.5} parent=11 // pred_check
          %p168 = pneg %p49
        $region14: #{seq2seq_forward.5} parent=11 // pred_check_branch
          %170 = sbr.rel (%p168) target = $region16
        $region15: #{seq2seq_forward.5} parent=11 // pred_region
          %s171 = smul.u32 2, %s20
          %p172 = scmp.lt.s32.totalorder %s171, 1
          %s173 = scalar_select %p172, %s171, 1
          %s174 = smul.addr %s173, 4
          %s175 = scalar_lea.vmem %s0, %s174
          %s176 = smul.u32 2, %s20
        $region16: #{seq2seq_forward.5} parent=11 // pred_fallthru
          _
        // Predicated region
        $region17: #{seq2seq_forward.5} parent=11 // pred_check
          %p177 = pneg %p101
        $region18: #{seq2seq_forward.5} parent=11 // pred_check_branch
          %179 = sbr.rel (%p177) target = $region20
        $region19: #{seq2seq_forward.5} parent=11 // pred_region
          %s180 = smul.u32 2, %s20
          %p181 = scmp.lt.s32.totalorder %s180, 1
          %s182 = scalar_select %p181, %s180, 1
          %s183 = smul.addr %s182, 8
          %s184 = scalar_lea.vmem %s2, %s183
          %s185 = smul.u32 2, %s20
        $region20: #{seq2seq_forward.5} parent=11 // pred_fallthru
          _
      $region12: #{seq2seq_forward.5} parent=5 // pred_fallthru
        _
      %p186 = scmp.lt.s32.totalorder %s11, 4
      // Predicated region
      $region21: #{seq2seq_forward.5} parent=5 // pred_check
        %p187 = pneg %p186
      $region22: #{seq2seq_forward.5} parent=5 // pred_check_branch
        %189 = sbr.rel (%p187) target = $region24
      $region23: #{seq2seq_forward.5} parent=5 // pred_region
        // Predicated region
        $region25: #{seq2seq_forward.5} parent=23 // pred_check
          %p190 = pneg %p69
        $region26: #{seq2seq_forward.5} parent=23 // pred_check_branch
          %192 = sbr.rel (%p190) target = $region28
        $region27: #{seq2seq_forward.5} parent=23 // pred_region
          %s193 = sand.u32 %s59, 1
          %s194 = sand.u32 %s59, 1
          %s195 = smul.addr %s194, 32
          %s196 = scalar_lea.vmem [#allocation5], %s195
          %s197 = smul.addr %s19, 4
          %s198 = scalar_lea.vmem %s1, %s197
          // Predicated region
          $region29: #{seq2seq_forward.5} parent=27 // pred_check
            _
          $region30: #{seq2seq_forward.5} parent=27 // pred_check_branch
            %200 = sbr.rel (0) target = $region32
          $region31: #{seq2seq_forward.5} parent=27 // pred_region
            // Predicated region
            $region33: #{seq2seq_forward.5} parent=31 // pred_check
              _
            $region34: #{seq2seq_forward.5} parent=31 // pred_check_branch
              %202 = sbr.rel target = $region36
            $region35: #{seq2seq_forward.5} parent=31 // pred_region
              // Predicated region
              $region48: #{seq2seq_forward.5} parent=35 // pred_check
                _
              $region49: #{seq2seq_forward.5} parent=35 // pred_check_branch
                %232 = sbr.rel (0) target = $region51
              $region50: #{seq2seq_forward.5} parent=35 // pred_region
                loop: start=0, step=1, limit=1
                $region52: #{seq2seq_forward.5} parent=50 // loop_pre_header
                  _
                $region53: #{seq2seq_forward.5} parent=50 // loop_header
                  %s234 = sphi 0, %s238
                  %p235 = scmp.ge.s32.totalorder %s234, 1
                  %s239 = sphi %s198, %s198
                  %s240 = sphi %s196, %s196
                $region54: #{seq2seq_forward.5} parent=50 // loop_header_branch
                  %237 = sbr.rel (%p235) target = $region58
                $region55: #{seq2seq_forward.5} parent=50 // loop_body
                  _
                $region56: #{seq2seq_forward.5} parent=50 // loop_footer
                  %s238 = sadd.s32 1, %s234
                $region57: #{seq2seq_forward.5} parent=50 // loop_footer_branch
                  %233 = sbr.rel target = $region53
                $region58: #{seq2seq_forward.5} parent=50 // loop_exit
                  _
                %s242 = ssub.s32 16, 1
                loop: start=0, step=1, limit=1
                $region59: #{seq2seq_forward.5} parent=50 // loop_pre_header
                  _
                $region60: #{seq2seq_forward.5} parent=50 // loop_header
                  %s244 = sphi 0, %s248
                  %p245 = scmp.ge.s32.totalorder %s244, 1
                  %s249 = sphi %s198, %s198
                  %s250 = sphi %s196, %s196
                $region61: #{seq2seq_forward.5} parent=50 // loop_header_branch
                  %247 = sbr.rel (%p245) target = $region65
                $region62: #{seq2seq_forward.5} parent=50 // loop_body
                  %v251 = vld [vmem:[%s249] sm:%s242]
                  %252 = vst [vmem:[%s250] sm:%s242] %v251
                  %v253 = vld [vmem:[%s249 + $0x10] sm:%s242]
                  %254 = vst [vmem:[%s250 + $0x4] sm:%s242] %v253
                  %v255 = vld [vmem:[%s249 + $0x20] sm:%s242]
                  %256 = vst [vmem:[%s250 + $0x8] sm:%s242] %v255
                  %v257 = vld [vmem:[%s249 + $0x30] sm:%s242]
                  %258 = vst [vmem:[%s250 + $0xc] sm:%s242] %v257
                  %v259 = vld [vmem:[%s249 + $0x40] sm:%s242]
                  %260 = vst [vmem:[%s250 + $0x10] sm:%s242] %v259
                  %v261 = vld [vmem:[%s249 + $0x50] sm:%s242]
                  %262 = vst [vmem:[%s250 + $0x14] sm:%s242] %v261
                  %v263 = vld [vmem:[%s249 + $0x60] sm:%s242]
                  %264 = vst [vmem:[%s250 + $0x18] sm:%s242] %v263
                  %v265 = vld [vmem:[%s249 + $0x70] sm:%s242]
                  %266 = vst [vmem:[%s250 + $0x1c] sm:%s242] %v265
                $region63: #{seq2seq_forward.5} parent=50 // loop_footer
                  %s248 = sadd.s32 1, %s244
                $region64: #{seq2seq_forward.5} parent=50 // loop_footer_branch
                  %243 = sbr.rel target = $region60
                $region65: #{seq2seq_forward.5} parent=50 // loop_exit
                  _
              $region51: #{seq2seq_forward.5} parent=35 // pred_fallthru
                _
            $region36: #{seq2seq_forward.5} parent=31 // pred_fallthru
              _
            // Predicated region
            $region37: #{seq2seq_forward.5} parent=31 // pred_check
              _
            $region38: #{seq2seq_forward.5} parent=31 // pred_check_branch
              %204 = sbr.rel (0) target = $region40
            $region39: #{seq2seq_forward.5} parent=31 // pred_region
              %s206 = ssub.s32 16, 1
              loop: start=0, step=1, limit=1
              $region41: #{seq2seq_forward.5} parent=39 // loop_pre_header
                _
              $region42: #{seq2seq_forward.5} parent=39 // loop_header
                %s208 = sphi 0, %s212
                %p209 = scmp.ge.s32.totalorder %s208, 1
                %s213 = sphi %s198, %s198
                %s214 = sphi %s196, %s196
              $region43: #{seq2seq_forward.5} parent=39 // loop_header_branch
                %211 = sbr.rel (%p209) target = $region47
              $region44: #{seq2seq_forward.5} parent=39 // loop_body
                %v215 = vld [vmem:[%s213] sm:%s206]
                %216 = vst [vmem:[%s214] sm:%s206] %v215
                %v217 = vld [vmem:[%s213 + $0x10] sm:%s206]
                %218 = vst [vmem:[%s214 + $0x4] sm:%s206] %v217
                %v219 = vld [vmem:[%s213 + $0x20] sm:%s206]
                %220 = vst [vmem:[%s214 + $0x8] sm:%s206] %v219
                %v221 = vld [vmem:[%s213 + $0x30] sm:%s206]
                %222 = vst [vmem:[%s214 + $0xc] sm:%s206] %v221
                %v223 = vld [vmem:[%s213 + $0x40] sm:%s206]
                %224 = vst [vmem:[%s214 + $0x10] sm:%s206] %v223
                %v225 = vld [vmem:[%s213 + $0x50] sm:%s206]
                %226 = vst [vmem:[%s214 + $0x14] sm:%s206] %v225
                %v227 = vld [vmem:[%s213 + $0x60] sm:%s206]
                %228 = vst [vmem:[%s214 + $0x18] sm:%s206] %v227
                %v229 = vld [vmem:[%s213 + $0x70] sm:%s206]
                %230 = vst [vmem:[%s214 + $0x1c] sm:%s206] %v229
              $region45: #{seq2seq_forward.5} parent=39 // loop_footer
                %s212 = sadd.s32 1, %s208
              $region46: #{seq2seq_forward.5} parent=39 // loop_footer_branch
                %207 = sbr.rel target = $region42
              $region47: #{seq2seq_forward.5} parent=39 // loop_exit
                _
            $region40: #{seq2seq_forward.5} parent=31 // pred_fallthru
              _
          $region32: #{seq2seq_forward.5} parent=27 // pred_fallthru
            _
          %267 = vnop
        $region28: #{seq2seq_forward.5} parent=23 // pred_fallthru
          _
      $region24: #{seq2seq_forward.5} parent=5 // pred_fallthru
        _
      %p268 = scmp.le.s32.totalorder 1, %s11
      %p269 = scmp.lt.s32.totalorder %s11, 5
      %p270 = pnand %p268, %p269
      %p271 = pneg %p270
      // Predicated region
      $region66: #{seq2seq_forward.5} parent=5 // pred_check
        _
      $region67: #{seq2seq_forward.5} parent=5 // pred_check_branch
        %273 = sbr.rel (%p270) target = $region69
      $region68: #{seq2seq_forward.5} parent=5 // pred_region
        %s274 = ssub.s32 %s11, 1
        %s275 = sand.u32 %s62, 1
        %s276 = sand.u32 %s62, 1
        %s277 = smul.addr %s276, 32
        %s278 = scalar_lea.vmem [#allocation5], %s277
        // Predicated region
        $region70: #{seq2seq_forward.5} parent=68 // pred_check
          %p279 = pneg %p75
        $region71: #{seq2seq_forward.5} parent=68 // pred_check_branch
          %281 = sbr.rel (%p279) target = $region73
        $region72: #{seq2seq_forward.5} parent=68 // pred_region
          _
        $region73: #{seq2seq_forward.5} parent=68 // pred_fallthru
          _
        %s282 = smul.u32 2, %s20
        %p283 = scmp.lt.s32.totalorder %s282, 1
        %s284 = scalar_select %p283, %s282, 1
        %s285 = smul.addr %s284, 4
        %s286 = scalar_lea.vmem %s0, %s285
        %p287 = pneg %p49
        %p288 = pneg %p46
        %s289 = sand.u32 %s62, 1
        %s290 = sand.u32 %s62, 1
        %s291 = smul.addr %s290, 32
        %s292 = scalar_lea.vmem [#allocation5], %s291
        %p293 = pneg %p75
        %p294 = pneg %p72
        %s295 = smul.u32 2, %s20
        %p296 = scmp.lt.s32.totalorder %s295, 1
        %s297 = scalar_select %p296, %s295, 1
        %s298 = smul.addr %s297, 8
        %s299 = scalar_lea.vmem %s2, %s298
        %p300 = pneg %p101
        %p301 = pneg %p98
        %p302 = pneg %p127
        %p303 = pneg %p124
        %p304 = scmp.lt.s32.totalorder %s20, 0
        %s305 = scalar_select %p304, %s20, 0
        %s306 = smul.addr %s305, 8
        %s307 = scalar_lea.vmem %s3, %s306
        %p308 = pneg %p153
        %p309 = pneg %p150
        %p310 = scmp.lt.s32.totalorder %s20, 0
        %s311 = scalar_select %p310, %s20, 0
        %s312 = smul.addr %s311, 8
        %s313 = scalar_lea.vmem %s4, %s312
        %s314 = smul.u32 2, %s20
        %p315 = scmp.lt.s32.totalorder %s314, 1
        %s316 = scalar_select %p315, %s314, 1
        %s317 = smul.addr %s316, 4
        %s318 = scalar_lea.vmem %s0, %s317
        %s319 = smul.u32 2, %s20
        %s320 = smul.u32 2, %s20
        %p321 = scmp.lt.s32.totalorder %s320, 1
        %s322 = scalar_select %p321, %s320, 1
        %s323 = smul.addr %s322, 8
        %s324 = scalar_lea.vmem %s2, %s323
        %s325 = smul.u32 2, %s20
        %p326 = scmp.lt.s32.totalorder %s20, 0
        %s327 = scalar_select %p326, %s20, 0
        %s328 = smul.addr %s327, 8
        %s329 = scalar_lea.vmem %s3, %s328
        %p330 = scmp.lt.s32.totalorder %s20, 0
        %s331 = scalar_select %p330, %s20, 0
        %s332 = smul.addr %s331, 8
        %s333 = scalar_lea.vmem %s4, %s332
        %p335 = scmp.eq.s32.totalorder %s21, 0
        // Predicated region
        $region74: #{seq2seq_forward.5} parent=68 // pred_check
          %p336 = pneg %p335
        $region75: #{seq2seq_forward.5} parent=68 // pred_check_branch
          %338 = sbr.rel (%p336) target = $region77
        $region76: #{seq2seq_forward.5} parent=68 // pred_region
          %vm339 = vcmask 7168
          %340 = vst.msk [vmem:[#allocation2] sm:$0xff] %vm339, -1e+30
          %341 = vst.msk [vmem:[#allocation2 + $0x8] sm:$0xff] %vm339, -1e+30
          %342 = vst.msk [vmem:[#allocation3] sm:$0xff] %vm339, 0.0
          %343 = vst.msk [vmem:[#allocation3 + $0x8] sm:$0xff] %vm339, 0.0
          %344 = vst.msk [vmem:[#allocation4] sm:$0xff] %vm339, 0.0
          %345 = vst.msk [vmem:[#allocation4 + $0x8] sm:$0xff] %vm339, 0.0
        $region77: #{seq2seq_forward.5} parent=68 // pred_fallthru
          _
        %v346 = vld [vmem:[%s318] sm:$0xf]
        %v347 = vld [vmem:[%s318 + $0x4] sm:$0xf]
        %v348 = vld [vmem:[%s278] sm:$0xf]
        %v349 = vld [vmem:[%s278 + $0x4] sm:$0xf]
        %v350 = vld [vmem:[%s278 + $0x8] sm:$0xf]
        %v351 = vld [vmem:[%s278 + $0xc] sm:$0xf]
        %v352 = vld [vmem:[%s278 + $0x10] sm:$0xf]
        %v353 = vld [vmem:[%s278 + $0x14] sm:$0xf]
        %v354 = vld [vmem:[%s278 + $0x18] sm:$0xf]
        %v355 = vld [vmem:[%s278 + $0x1c] sm:$0xf]
        %v358 = vunpack.c.l.b16 %v346
        %v359 = vunpack.c.l.b16 %v347
        %v360 = vpack.c.b16 %v359, %v358
        %v369 = vunpack.c.l.b16 %v348
        %v370 = vunpack.c.l.b16 %v349
        %v371 = vunpack.c.l.b16 %v350
        %v372 = vunpack.c.l.b16 %v351
        %v373 = vunpack.c.l.b16 %v352
        %v374 = vunpack.c.l.b16 %v353
        %v375 = vunpack.c.l.b16 %v354
        %v376 = vunpack.c.l.b16 %v355
        %v377 = vpack.c.b16 %v370, %v369
        %v378 = vpack.c.b16 %v372, %v371
        %v379 = vpack.c.b16 %v374, %v373
        %v380 = vpack.c.b16 %v376, %v375
        %vm385 = vcmask 523264
        %v387 = vsel %vm385, %v360, 0
        %389 = vmatprep.subr.bf16.mxu0 0
        %390 = vmatpush1.bf16.msra.mxu0 0
        %391 = vmatprep.subr.bf16.mxu0 0
        %392 = vmatpush1.bf16.msra.mxu0 0
        %393 = vmatprep.subr.bf16.mxu0 0
        %394 = vmatpush1.bf16.msra.mxu0 0
        %395 = vmatprep.subr.bf16.mxu0 0
        %396 = vmatpush1.bf16.msra.mxu0 0
        %397 = vmatprep.subr.bf16.mxu0 0
        %398 = vmatpush1.bf16.msra.mxu0 %v380
        %399 = vmatprep.subr.bf16.mxu0 0
        %400 = vmatpush1.bf16.msra.mxu0 %v379
        %401 = vmatprep.subr.bf16.mxu0 0
        %402 = vmatpush1.bf16.msra.mxu0 %v378
        %403 = vmatprep.subr.bf16.mxu0 0
        %404 = vmatpush1.bf16.msra.mxu0 %v377
        %405 = vmatprep.subr.bf16.mxu0 0
        %406 = vmatpush2.bf16.msra.mxu0 0
        %407 = vmatprep.subr.bf16.mxu0 0
        %408 = vmatpush2.bf16.msra.mxu0 0
        %409 = vmatprep.subr.bf16.mxu0 0
        %410 = vmatpush2.bf16.msra.mxu0 0
        %411 = vmatprep.subr.bf16.mxu0 0
        %412 = vmatpush2.bf16.msra.mxu0 0
        %413 = vmatprep.subr.bf16.mxu0 0
        %414 = vmatpush2.bf16.msra.mxu0 0
        %415 = vmatprep.subr.bf16.mxu0 0
        %416 = vmatpush2.bf16.msra.mxu0 0
        %417 = vmatprep.subr.bf16.mxu0 0
        %418 = vmatpush2.bf16.msra.mxu0 0
        %419 = vmatprep.subr.bf16.mxu0 0
        %420 = vmatpush2.bf16.msra.mxu0 0
        %421 = vmatprep.mubr.bf16.mxu0 0
        %422 = vmatmul.mubr.bf16.gmra.mxu0 %v387
        %v423 = vpop.f32.mrf.mxu0
        %v424 = vadd.f32 0.0, %v423
        %v425 = vpop.f32.mrf.mxu0
        %v426 = vpop.f32.mrf.mxu0
        %v427 = vadd.f32 0.0, %v426
        %v428 = vpop.f32.mrf.mxu0
        %429 = vdwg.mxu0
        %v430 = vld [vmem:[%s324] sm:$0xff]
        %v431 = vld [vmem:[%s324 + $0x8] sm:$0xff]
        %v432 = vlaneseq
        %v433 = vand.u32 %v432, 127
        %s434 = smul.u32 %s21, 128
        %v435 = vstv %s434
        %v436 = vadd.s32 %v433, %v435
        %v437 = vld [vmem:[#allocation4] sm:$0xff]
        %v438 = vld [vmem:[#allocation4 + $0x8] sm:$0xff]
        %439 = vset.pattern.permute.xlu0 0
        %440 = vperm.xlu0 %439, %v430
        %v441 = vpop.permute.xlu0 %440
        %442 = vset.pattern.permute.xlu0 0
        %443 = vperm.xlu0 %442, %v431
        %v444 = vpop.permute.xlu0 %443
        %vm445 = vcmp.eq.s32.totalorder %v436, %v441
        %vm446 = vcmp.eq.s32.totalorder %v436, %v444
        %v447 = vsel %vm445, %v424, 0.0
        %v448 = vsel %vm446, %v427, 0.0
        %449 = vadd.xlane.f32.xlu0 %v447
        %v450 = vpop.xlane.xlu0 %449
        %451 = vadd.xlane.f32.xlu0 %v448
        %v452 = vpop.xlane.xlu0 %451
        %v453 = vadd.f32 %v437, %v450
        %v454 = vadd.f32 %v438, %v452
        %vm455 = vcmask 7168
        %456 = vst.msk [vmem:[#allocation4] sm:$0xff] %vm455, %v453
        %457 = vst.msk [vmem:[#allocation4 + $0x8] sm:$0xff] %vm455, %v454
        %v458 = vld [vmem:[#allocation2] sm:$0xff]
        %v459 = vld [vmem:[#allocation2 + $0x8] sm:$0xff]
        %460 = vmax.xlane.f32.xlu0 %v424
        %v461 = vpop.xlane.xlu0 %460
        %462 = vmax.xlane.f32.xlu0 %v427
        %v463 = vpop.xlane.xlu0 %462
        %v464 = vmax.f32 %v458, %v461
        %v465 = vmax.f32 %v459, %v463
        %v466 = vld [vmem:[#allocation3] sm:$0xff]
        %v467 = vld [vmem:[#allocation3 + $0x8] sm:$0xff]
        %v468 = vsub.f32 %v458, %v464
        %v469 = vsub.f32 %v459, %v465
        %v470 = vmul.f32 %v468, 1.442695
        %v471 = vpow.pop %v470
        %v472 = vmul.f32 %v469, 1.442695
        %v473 = vpow.pop %v472
        %v474 = vmul.f32 %v466, %v471
        %v475 = vmul.f32 %v467, %v473
        %477 = vset.pattern.permute.xlu0 0
        %478 = vperm.xlu0 %477, %v464
        %v479 = vpop.permute.xlu0 %478
        %482 = vset.pattern.permute.xlu0 0
        %483 = vperm.xlu0 %482, %v465
        %v484 = vpop.permute.xlu0 %483
        %v486 = vsub.f32 %v424, %v479
        %v487 = vsub.f32 %v427, %v484
        %v488 = vmul.f32 %v486, 1.442695
        %v489 = vpow.pop %v488
        %v490 = vmul.f32 %v487, 1.442695
        %v491 = vpow.pop %v490
        %492 = vadd.xlane.f32.xlu0 %v489
        %v493 = vpop.xlane.xlu0 %492
        %494 = vadd.xlane.f32.xlu0 %v491
        %v495 = vpop.xlane.xlu0 %494
        %v496 = vadd.f32 %v474, %v493
        %v497 = vadd.f32 %v475, %v495
        %498 = vst.msk [vmem:[#allocation3] sm:$0xff] %vm455, %v496
        %499 = vst.msk [vmem:[#allocation3 + $0x8] sm:$0xff] %vm455, %v497
        %500 = vst.msk [vmem:[#allocation2] sm:$0xff] %vm455, %v464
        %501 = vst.msk [vmem:[#allocation2 + $0x8] sm:$0xff] %vm455, %v465
        %p502 = scmp.eq.s32.totalorder %s21, 3
        // Predicated region
        $region78: #{seq2seq_forward.5} parent=68 // pred_check
          %p503 = pneg %p502
        $region79: #{seq2seq_forward.5} parent=68 // pred_check_branch
          %505 = sbr.rel (%p503) target = $region81
        $region80: #{seq2seq_forward.5} parent=68 // pred_region
          %vm506 = vcmp.ne.s32.totalorder %v430, 1
          %vm507 = vcmp.ne.s32.totalorder %v431, 1
          %v508 = vsel %vm506, 1, 0
          %v509 = vsel %vm507, 1, 0
          %v510 = vcvt.s32.f32 %v508
          %v511 = vcvt.s32.f32 %v509
          %v512 = vld [vmem:[#allocation2] sm:$0xff]
          %v513 = vld [vmem:[#allocation2 + $0x8] sm:$0xff]
          %v514 = vld [vmem:[#allocation3] sm:$0xff]
          %v515 = vld [vmem:[#allocation3 + $0x8] sm:$0xff]
          %v516 = vlog2.pop %v514
          %v517 = vmul.f32 %v516, 0.6931472
          %v518 = vlog2.pop %v515
          %v519 = vmul.f32 %v518, 0.6931472
          %v520 = vadd.f32 %v512, %v517
          %v521 = vadd.f32 %v513, %v519
          %v522 = vld [vmem:[#allocation4] sm:$0xff]
          %v523 = vld [vmem:[#allocation4 + $0x8] sm:$0xff]
          %v524 = vsub.f32 %v520, %v522
          %v525 = vsub.f32 %v521, %v523
          %v526 = vmul.f32 %v524, %v510
          %v527 = vmul.f32 %v525, %v511
          %v528 = vsel %vm455, %v526, 0.0
          %v529 = vsel %vm455, %v527, 0.0
          %v530 = vadd.f32 %v528, %v529
          %531 = vadd.xlane.f32.xlu0 %v530
          %v532 = vpop.xlane.xlu0 %531
          %v533 = vrot.slane %v532, 4
          %v534 = vadd.f32 %v532, %v533
          %v535 = vrot.slane %v534, 2
          %v536 = vadd.f32 %v534, %v535
          %v537 = vrot.slane %v536, 1
          %v538 = vadd.f32 %v536, %v537
          %s539 = vtos %v538
          %v540 = vstv %s539
          %541 = vst [vmem:[%s329] sm:$0xff] %v540
          %v542 = vsel %vm455, %v510, 0.0
          %v543 = vsel %vm455, %v511, 0.0
          %v544 = vadd.f32 %v542, %v543
          %545 = vadd.xlane.f32.xlu0 %v544
          %v546 = vpop.xlane.xlu0 %545
          %v547 = vrot.slane %v546, 4
          %v548 = vadd.f32 %v546, %v547
          %v549 = vrot.slane %v548, 2
          %v550 = vadd.f32 %v548, %v549
          %v551 = vrot.slane %v550, 1
          %v552 = vadd.f32 %v550, %v551
          %s553 = vtos %v552
          %v554 = vstv %s553
          %555 = vst [vmem:[%s333] sm:$0xff] %v554
        $region81: #{seq2seq_forward.5} parent=68 // pred_fallthru
          _
        %p556 = scmp.lt.s32.totalorder %s20, 0
        %s557 = scalar_select %p556, %s20, 0
        %s558 = smul.addr %s557, 8
        %s559 = scalar_lea.vmem %s3, %s558
        %p560 = scmp.lt.s32.totalorder %s20, 0
        %s561 = scalar_select %p560, %s20, 0
        %s562 = smul.addr %s561, 8
        %s563 = scalar_lea.vmem %s4, %s562
        // Predicated region
        $region82: #{seq2seq_forward.5} parent=68 // pred_check
          %p564 = pneg %p124
        $region83: #{seq2seq_forward.5} parent=68 // pred_check_branch
          %566 = sbr.rel (%p564) target = $region85
        $region84: #{seq2seq_forward.5} parent=68 // pred_region
          _
        $region85: #{seq2seq_forward.5} parent=68 // pred_fallthru
          _
        // Predicated region
        $region86: #{seq2seq_forward.5} parent=68 // pred_check
          %p567 = pneg %p150
        $region87: #{seq2seq_forward.5} parent=68 // pred_check_branch
          %569 = sbr.rel (%p567) target = $region89
        $region88: #{seq2seq_forward.5} parent=68 // pred_region
          _
        $region89: #{seq2seq_forward.5} parent=68 // pred_fallthru
          _
        // Predicated region
        $region90: #{seq2seq_forward.5} parent=68 // pred_check
          %p570 = pneg %p124
        $region91: #{seq2seq_forward.5} parent=68 // pred_check_branch
          %572 = sbr.rel (%p570) target = $region93
        $region92: #{seq2seq_forward.5} parent=68 // pred_region
          %p573 = scmp.lt.s32.totalorder %s20, 0
          %s574 = scalar_select %p573, %s20, 0
          %s575 = smul.addr %s574, 8
          %s576 = scalar_lea.vmem %s3, %s575
        $region93: #{seq2seq_forward.5} parent=68 // pred_fallthru
          _
        // Predicated region
        $region94: #{seq2seq_forward.5} parent=68 // pred_check
          %p577 = pneg %p150
        $region95: #{seq2seq_forward.5} parent=68 // pred_check_branch
          %579 = sbr.rel (%p577) target = $region97
        $region96: #{seq2seq_forward.5} parent=68 // pred_region
          %p580 = scmp.lt.s32.totalorder %s20, 0
          %s581 = scalar_select %p580, %s20, 0
          %s582 = smul.addr %s581, 8
          %s583 = scalar_lea.vmem %s4, %s582
        $region97: #{seq2seq_forward.5} parent=68 // pred_fallthru
          _
      $region69: #{seq2seq_forward.5} parent=5 // pred_fallthru
        _
      %p584 = scmp.le.s32.totalorder 2, %s11
      // Predicated region
      $region98: #{seq2seq_forward.5} parent=5 // pred_check
        %p585 = pneg %p584
      $region99: #{seq2seq_forward.5} parent=5 // pred_check_branch
        %587 = sbr.rel (%p585) target = $region101
      $region100: #{seq2seq_forward.5} parent=5 // pred_region
        %s588 = ssub.s32 %s11, 2
      $region101: #{seq2seq_forward.5} parent=5 // pred_fallthru
        _
    $region6: #{seq2seq_forward.5} parent=1 // loop_footer
      %s15 = sadd.s32 1, %s11
    $region7: #{seq2seq_forward.5} parent=1 // loop_footer_branch
      %10 = sbr.rel target = $region3
    $region8: #{seq2seq_forward.5} parent=1 // loop_exit
      _

</llo_original>
